<compile_context>
chip_gen: v6e
topology: v6e:2x2x1
jax: 0.10.0
libtpu: 0.0.40
codegen_flags: <defaults>
</compile_context>

<pallas_src>
import functools

import jax
import jax.numpy as jnp
from jax.experimental import pallas as pl
from jax.experimental.pallas import tpu as pltpu

EPS = 1e-5


def _round_up(v, m):
    return ((v + m - 1) // m) * m


def _interior_and_valid(tile_idx, tile_l, hpad, wpad, l_valid):
    """Per-lane 'interior (non-border) pixel' and 'pos < L' predicates.

    Positions are per-image (pos in [0, Lp)), row-major over (h, w).  The
    (h, w) decode uses f32 division; exact while Hp*Wp per image < ~2^23.
    """
    pos_i = jax.lax.broadcasted_iota(jnp.int32, (1, tile_l), 1) + tile_idx * tile_l
    pos = pos_i.astype(jnp.float32)
    hh = jnp.floor(pos / float(wpad))
    ww = pos - float(wpad) * hh
    interior = ((hh >= 1.0) & (hh <= float(hpad - 2)) &
                (ww >= 1.0) & (ww <= float(wpad - 2)))
    valid = pos_i < l_valid
    return interior, valid


def _xstats_kernel(x_ref, s_ref):
    """Accumulate per-channel [sum, sum^2] of x (zero pads contribute nothing)."""
    first = (pl.program_id(0) == 0) & (pl.program_id(1) == 0)

    @pl.when(first)
    def _init():
        s_ref[...] = jnp.zeros_like(s_ref)

    x = x_ref[...]                                            # (Cin, T)
    s_ref[...] += jnp.concatenate(
        [jnp.sum(x, axis=1, keepdims=True),
         jnp.sum(x * x, axis=1, keepdims=True)], axis=1)


def _moments_kernel(x_ref, pc_ref, pi_ref, s_ref, *, hpad, wpad, l_valid):
    """Accumulate per-out-channel [S(c3), S(c3^2), S(cx), S(cx^2), S(cx*c3)]."""
    first = (pl.program_id(0) == 0) & (pl.program_id(1) == 0)

    @pl.when(first)
    def _init():
        s_ref[...] = jnp.zeros_like(s_ref)

    x = x_ref[...]                                            # (Cin, T)
    cin, tile_l = x_ref.shape
    cout = pc_ref.shape[0]

    interior, valid = _interior_and_valid(pl.program_id(1), tile_l,
                                          hpad, wpad, l_valid)
    xb = x * pi_ref[:, 0:1] + pi_ref[:, 1:2]                  # bn3(x), affine folded
    v3 = jnp.where(interior, jnp.maximum(xb, 0.0), 0.0)       # relu + conv zero-pad

    wmat = pc_ref[:, 0:cin]                                   # (Cout, Cin)
    bvec = pc_ref[:, cin:cin + 1]                             # (Cout, 1)
    c3 = jnp.broadcast_to(bvec, (cout, tile_l))
    cx = jnp.broadcast_to(bvec, (cout, tile_l))
    for c in range(cin):                                      # Cin=3: VPU FMAs
        wc = wmat[:, c:c + 1]
        c3 = c3 + wc * v3[c:c + 1, :]
        cx = cx + wc * x[c:c + 1, :]

    vmask = valid.astype(jnp.float32)                         # drop L->Lp pad lanes
    c3 = c3 * vmask
    cx = cx * vmask
    s_ref[...] += jnp.concatenate([
        jnp.sum(c3, axis=1, keepdims=True),
        jnp.sum(c3 * c3, axis=1, keepdims=True),
        jnp.sum(cx, axis=1, keepdims=True),
        jnp.sum(cx * cx, axis=1, keepdims=True),
        jnp.sum(cx * c3, axis=1, keepdims=True)], axis=1)


def _apply_kernel(x_ref, pc_ref, pi_ref, o_ref, *, hpad, wpad, l_valid):
    """out = Wx_s @ x + Wv_s @ (relu(bn3(x))*interior) + r1   (all BN folded)."""
    x = x_ref[...]                                            # (Cin, T)
    cin, tile_l = x_ref.shape
    cout = pc_ref.shape[0]

    interior, _ = _interior_and_valid(pl.program_id(1), tile_l,
                                      hpad, wpad, l_valid)
    xb = x * pi_ref[:, 0:1] + pi_ref[:, 1:2]
    v3 = jnp.where(interior, jnp.maximum(xb, 0.0), 0.0)

    wx = pc_ref[:, 0:cin]                                     # (Cout, Cin)
    wv = pc_ref[:, cin:2 * cin]                                # (Cout, Cin)
    r1 = pc_ref[:, 2 * cin:2 * cin + 1]                        # (Cout, 1)

    # Note: on v7x this could be one MXU jnp.dot((Cout,2*Cin) x (2*Cin,T));
    # kept as VPU broadcast-FMAs for robust lowering at K=6.
    acc = jnp.broadcast_to(r1, (cout, tile_l))
    for c in range(cin):
        acc = acc + wx[:, c:c + 1] * x[c:c + 1, :] + wv[:, c:c + 1] * v3[c:c + 1, :]
    o_ref[...] = acc                                          # lanes >= L are dropped


def resblock_forward(x, conv_w, conv_b, gamma3, beta3, gamma16, beta16,
                     *, max_tile_l=32768):
    assert max_tile_l % 128 == 0
    f32 = jnp.float32
    N, C, H, W = x.shape
    Cout = conv_w.shape[0]
    Hp, Wp = H + 2, W + 2
    L = Hp * Wp                                    # conv-output pixels per image
    tile_l = min(max_tile_l, _round_up(L, 128))
    nt = (L + tile_l - 1) // tile_l
    Lp = nt * tile_l

    # Keep NCHW: zero-pad spatial dims (the conv's padding), flatten per image,
    # pad the pixel axis up to the lane tile.  No transpose anywhere.
    xp = jnp.pad(x.astype(f32), ((0, 0), (0, 0), (1, 1), (1, 1)))
    xf = jnp.pad(xp.reshape(N, C, L), ((0, 0), (0, 0), (0, Lp - L)))

    w2d = conv_w.reshape(Cout, C).astype(f32)                 # (Cout, Cin)
    bflat = conv_b.reshape(Cout).astype(f32)
    g3 = gamma3.reshape(C).astype(f32)
    b3 = beta3.reshape(C).astype(f32)
    g16 = gamma16.reshape(Cout).astype(f32)
    b16 = beta16.reshape(Cout).astype(f32)

    grid = (N, nt)
    x_spec = pl.BlockSpec((None, C, tile_l), lambda n, t: (n, 0, t))

    def full_spec(shape):
        return pl.BlockSpec(shape, lambda n, t: tuple(0 for _ in shape))

    cp_acc = pltpu.CompilerParams(dimension_semantics=("arbitrary", "arbitrary"),
                                  vmem_limit_bytes=48 * 1024 * 1024)
    cp_par = pltpu.CompilerParams(dimension_semantics=("parallel", "parallel"),
                                  vmem_limit_bytes=48 * 1024 * 1024)

    # ---- pass 1: per-channel batch stats of x (pads contribute zero) ----
    xstats = pl.pallas_call(
        _xstats_kernel,
        out_shape=jax.ShapeDtypeStruct((C, 2), f32),
        grid=grid,
        in_specs=[x_spec],
        out_specs=full_spec((C, 2)),
        compiler_params=cp_acc,
    )(xf)

    cnt3 = float(N * H * W)
    mean3 = xstats[:, 0] / cnt3
    var3 = jnp.maximum(xstats[:, 1] / cnt3 - mean3 * mean3, 0.0)
    scale3 = g3 * jax.lax.rsqrt(var3 + EPS)
    shift3 = b3 - mean3 * scale3
    pi = jnp.stack([scale3, shift3], axis=1)                  # (C, 2)

    # ---- pass 2: moments of c3 = conv(relu(bn3(x))) and cx = conv(x) ----
    pc2 = jnp.concatenate([w2d, bflat[:, None]], axis=1)      # (Cout, C+1)
    mom = pl.pallas_call(
        functools.partial(_moments_kernel, hpad=Hp, wpad=Wp, l_valid=L),
        out_shape=jax.ShapeDtypeStruct((Cout, 5), f32),
        grid=grid,
        in_specs=[x_spec, full_spec((Cout, C + 1)), full_spec((C, 2))],
        out_specs=full_spec((Cout, 5)),
        compiler_params=cp_acc,
    )(xf, pc2, pi)

    # Derive both 16-channel BN affines analytically (tiny-vector glue):
    #   v2 = a*c3 + k0 ;  y = cx + v2 ;  out = sy*y + ty
    rv = float(N * L)                                         # bn16 count = N*Hp*Wp
    S1, S2, T1, T2, XT = (mom[:, j] for j in range(5))
    mu_c = S1 / rv
    var_c = jnp.maximum(S2 / rv - mu_c * mu_c, 0.0)
    a = g16 * jax.lax.rsqrt(var_c + EPS)
    k0 = b16 - a * mu_c
    mu_y = (T1 + a * S1) / rv + k0
    ey2 = (T2 + a * a * S2 + 2.0 * a * XT) / rv \
        + 2.0 * k0 * (T1 + a * S1) / rv + k0 * k0
    var_y = jnp.maximum(ey2 - mu_y * mu_y, 0.0)
    sy = g16 * jax.lax.rsqrt(var_y + EPS)
    ty = b16 - mu_y * sy

    wx = w2d * sy[:, None]                                    # conv(x) path
    wv = w2d * (a * sy)[:, None]                               # conv(v3) path
    r1 = bflat * (sy + a * sy) + k0 * sy + ty
    pc3 = jnp.concatenate([wx, wv, r1[:, None]], axis=1)      # (Cout, 2C+1)

    # ---- pass 3: fused apply, writes (N, Cout, L) directly (free NCHW reshape)
    out_flat = pl.pallas_call(
        functools.partial(_apply_kernel, hpad=Hp, wpad=Wp, l_valid=L),
        out_shape=jax.ShapeDtypeStruct((N, Cout, L), f32),
        grid=grid,
        in_specs=[x_spec, full_spec((Cout, 2 * C + 1)), full_spec((C, 2))],
        out_specs=pl.BlockSpec((None, Cout, tile_l), lambda n, t: (n, 0, t)),
        compiler_params=cp_par,
    )(xf, pc3, pi)

    return out_flat.reshape(N, Cout, Hp, Wp)                  # layout-preserving


def resblock_reference(x, conv_w, conv_b, gamma3, beta3, gamma16, beta16):
    """Pure-JAX reference mirroring the (fixed) PyTorch forward."""
    def bn(t, g, bt):
        mu = jnp.mean(t, axis=(0, 2, 3), keepdims=True)
        var = jnp.var(t, axis=(0, 2, 3), keepdims=True)       # biased, like batch_norm
        return (t - mu) * jax.lax.rsqrt(var + EPS) * g.reshape(1, -1, 1, 1) \
               + bt.reshape(1, -1, 1, 1)

    def conv(t):
        y = jax.lax.conv_general_dilated(
            t, conv_w, window_strides=(1, 1), padding=[(1, 1), (1, 1)],
            dimension_numbers=("NCHW", "OIHW", "NCHW"))
        return y + conv_b.reshape(1, -1, 1, 1)

    v3 = jnp.maximum(bn(x, gamma3, beta3), 0.0)
    v2 = bn(conv(v3), gamma16, beta16)
    v1 = bn(conv(x) + v2, gamma16, beta16)
    return v1


if __name__ == "__main__":
    key = jax.random.PRNGKey(0)
    kx, kw, kb = jax.random.split(key, 3)

    N, C, H, W = 2, 3, 16, 16
    Cout = 16

    x = jax.random.normal(kx, (N, C, H, W), jnp.float32)
    conv_w = jax.random.normal(kw, (Cout, C, 1, 1), jnp.float32) * 0.2
    conv_b = jax.random.normal(kb, (Cout,), jnp.float32) * 0.1
    gamma3 = jnp.ones((C,), jnp.float32)
    beta3 = jnp.zeros((C,), jnp.float32)
    gamma16 = jnp.ones((Cout,), jnp.float32)
    beta16 = jnp.zeros((Cout,), jnp.float32)

    fwd = jax.jit(resblock_forward)
    out = jax.block_until_ready(
        fwd(x, conv_w, conv_b, gamma3, beta3, gamma16, beta16))

    ref = resblock_reference(x, conv_w, conv_b, gamma3, beta3, gamma16, beta16)
    assert out.shape == (N, Cout, H + 2, W + 2), out.shape
    assert jnp.allclose(out, ref, atol=2e-3, rtol=2e-3), \
        float(jnp.max(jnp.abs(out - ref)))

    print("KERNEL_OK")
</pallas_src>

<mosaic_0001>
module attributes {stable_mosaic.version = 11 : i64} {
  func.func @_xstats_kernel(%arg0: i32, %arg1: i32, %arg2: memref<1x3x384xf32, #tpu.memory_space<vmem>>, %arg3: memref<3x2xf32, #tpu.memory_space<vmem>>) attributes {dimension_semantics = [#tpu.dimension_semantics<arbitrary>, #tpu.dimension_semantics<arbitrary>], iteration_bounds = array<i64: 2, 1>, scalar_prefetch = 0 : i64, scratch_operands = 0 : i64, tpu.core_type = #tpu.core_type<tc>, window_params = [{transform_indices = @transform_0, window_bounds = array<i64: 1, 3, 384>}, {pipeline_mode = #tpu.pipeline_mode<synchronous>, transform_indices = @transform_1, window_bounds = array<i64: 3, 2>}]} {
    %c0_i32 = arith.constant 0 : i32
    %0 = arith.cmpi eq, %arg0, %c0_i32 : i32
    %c0_i32_0 = arith.constant 0 : i32
    %1 = arith.cmpi eq, %arg1, %c0_i32_0 : i32
    %2 = arith.andi %0, %1 : i1
    %3 = arith.extui %2 : i1 to i32
    %c0_i32_1 = arith.constant 0 : i32
    %4 = arith.cmpi ne, %3, %c0_i32_1 : i32
    scf.if %4 {
      %cst_9 = arith.constant 0.000000e+00 : f32
      %16 = vector.broadcast %cst_9 : f32 to vector<3x2xf32>
      %c0_10 = arith.constant 0 : index
      %c0_11 = arith.constant 0 : index
      %17 = vector.load %arg3[%c0_10, %c0_11] : memref<3x2xf32, #tpu.memory_space<vmem>>, vector<3x2xf32>
      tpu.vector_store %arg3[%c0_10, %c0_11], %16 {strides = array<i32>} : memref<3x2xf32, #tpu.memory_space<vmem>>, vector<3x2xf32>,
    } else {
    }
    %c0 = arith.constant 0 : index
    %c0_2 = arith.constant 0 : index
    %c0_3 = arith.constant 0 : index
    %5 = vector.load %arg2[%c0, %c0_2, %c0_3] : memref<1x3x384xf32, #tpu.memory_space<vmem>>, vector<1x3x384xf32>
    %6 = vector.shape_cast %5 : vector<1x3x384xf32> to vector<3x384xf32>
    %c0_4 = arith.constant 0 : index
    %c0_5 = arith.constant 0 : index
    %7 = vector.load %arg3[%c0_4, %c0_5] : memref<3x2xf32, #tpu.memory_space<vmem>>, vector<3x2xf32>
    %cst = arith.constant dense<0.000000e+00> : vector<3xf32>
    %8 = vector.multi_reduction <add>, %6, %cst [1] : vector<3x384xf32> to vector<3xf32>
    %9 = vector.shape_cast %8 : vector<3xf32> to vector<3x1xf32>
    %10 = arith.mulf %6, %6 : vector<3x384xf32>
    %cst_6 = arith.constant dense<0.000000e+00> : vector<3xf32>
    %11 = vector.multi_reduction <add>, %10, %cst_6 [1] : vector<3x384xf32> to vector<3xf32>
    %12 = vector.shape_cast %11 : vector<3xf32> to vector<3x1xf32>
    %13 = tpu.concatenate %9, %12 in 1 : vector<3x1xf32>, vector<3x1xf32> -> vector<3x2xf32>
    %14 = arith.addf %7, %13 : vector<3x2xf32>
    %c0_7 = arith.constant 0 : index
    %c0_8 = arith.constant 0 : index
    %15 = vector.load %arg3[%c0_7, %c0_8] : memref<3x2xf32, #tpu.memory_space<vmem>>, vector<3x2xf32>
    tpu.vector_store %arg3[%c0_7, %c0_8], %14 {strides = array<i32>} : memref<3x2xf32, #tpu.memory_space<vmem>>, vector<3x2xf32>,
    return
  }
  func.func @transform_0(%arg0: i32, %arg1: i32) -> (i32, i32, i32) {
    %c0_i32 = arith.constant 0 : i32
    %c0_i32_0 = arith.constant 0 : i32
    return %arg0, %c0_i32, %arg1 : i32, i32, i32
  }
  func.func @transform_1(%arg0: i32, %arg1: i32) -> (i32, i32) {
    %c0_i32 = arith.constant 0 : i32
    %c0_i32_0 = arith.constant 0 : i32
    %c0_i32_1 = arith.constant 0 : i32
    return %c0_i32, %c0_i32_0 : i32, i32
  }
}

module attributes {stable_mosaic.version = 11 : i64} {
  func.func @_moments_kernel(%arg0: i32, %arg1: i32, %arg2: memref<1x3x384xf32, #tpu.memory_space<vmem>>, %arg3: memref<16x4xf32, #tpu.memory_space<vmem>>, %arg4: memref<3x2xf32, #tpu.memory_space<vmem>>, %arg5: memref<16x5xf32, #tpu.memory_space<vmem>>) attributes {dimension_semantics = [#tpu.dimension_semantics<arbitrary>, #tpu.dimension_semantics<arbitrary>], iteration_bounds = array<i64: 2, 1>, scalar_prefetch = 0 : i64, scratch_operands = 0 : i64, tpu.core_type = #tpu.core_type<tc>, window_params = [{transform_indices = @transform_0, window_bounds = array<i64: 1, 3, 384>}, {pipeline_mode = #tpu.pipeline_mode<synchronous>, transform_indices = @transform_1, window_bounds = array<i64: 16, 4>}, {pipeline_mode = #tpu.pipeline_mode<synchronous>, transform_indices = @transform_2, window_bounds = array<i64: 3, 2>}, {pipeline_mode = #tpu.pipeline_mode<synchronous>, transform_indices = @transform_3, window_bounds = array<i64: 16, 5>}]} {
    %c0_i32 = arith.constant 0 : i32
    %0 = arith.cmpi eq, %arg0, %c0_i32 : i32
    %c0_i32_0 = arith.constant 0 : i32
    %1 = arith.cmpi eq, %arg1, %c0_i32_0 : i32
    %2 = arith.andi %0, %1 : i1
    %3 = arith.extui %2 : i1 to i32
    %c0_i32_1 = arith.constant 0 : i32
    %4 = arith.cmpi ne, %3, %c0_i32_1 : i32
    scf.if %4 {
      %cst_26 = arith.constant 0.000000e+00 : f32
      %105 = vector.broadcast %cst_26 : f32 to vector<16x5xf32>
      %c0_27 = arith.constant 0 : index
      %c0_28 = arith.constant 0 : index
      %106 = vector.load %arg5[%c0_27, %c0_28] : memref<16x5xf32, #tpu.memory_space<vmem>>, vector<16x5xf32>
      tpu.vector_store %arg5[%c0_27, %c0_28], %105 {strides = array<i32>} : memref<16x5xf32, #tpu.memory_space<vmem>>, vector<16x5xf32>,
    } else {
    }
    %c0 = arith.constant 0 : index
    %c0_2 = arith.constant 0 : index
    %c0_3 = arith.constant 0 : index
    %5 = vector.load %arg2[%c0, %c0_2, %c0_3] : memref<1x3x384xf32, #tpu.memory_space<vmem>>, vector<1x3x384xf32>
    %6 = vector.shape_cast %5 : vector<1x3x384xf32> to vector<3x384xf32>
    %7 = tpu.iota {dimensions = array<i32: 1>} : vector<1x384xi32>
    %c384_i32 = arith.constant 384 : i32
    %8 = arith.muli %arg1, %c384_i32 : i32
    %9 = vector.broadcast %8 : i32 to vector<1x384xi32>
    %10 = arith.addi %7, %9 : vector<1x384xi32>
    %11 = arith.sitofp %10 : vector<1x384xi32> to vector<1x384xf32>
    %cst = arith.constant 1.800000e+01 : f32
    %12 = vector.broadcast %cst : f32 to vector<1x384xf32>
    %13 = arith.divf %11, %12 : vector<1x384xf32>
    %14 = math.floor %13 : vector<1x384xf32>
    %cst_4 = arith.constant 1.800000e+01 : f32
    %15 = vector.broadcast %cst_4 : f32 to vector<1x384xf32>
    %16 = arith.mulf %15, %14 : vector<1x384xf32>
    %17 = arith.subf %11, %16 : vector<1x384xf32>
    %cst_5 = arith.constant 1.000000e+00 : f32
    %18 = vector.broadcast %cst_5 : f32 to vector<1x384xf32>
    %19 = arith.cmpf oge, %14, %18 : vector<1x384xf32>
    %cst_6 = arith.constant 1.600000e+01 : f32
    %20 = vector.broadcast %cst_6 : f32 to vector<1x384xf32>
    %21 = arith.cmpf ole, %14, %20 : vector<1x384xf32>
    %22 = arith.andi %19, %21 : vector<1x384xi1>
    %cst_7 = arith.constant 1.000000e+00 : f32
    %23 = vector.broadcast %cst_7 : f32 to vector<1x384xf32>
    %24 = arith.cmpf oge, %17, %23 : vector<1x384xf32>
    %25 = arith.andi %22, %24 : vector<1x384xi1>
    %cst_8 = arith.constant 1.600000e+01 : f32
    %26 = vector.broadcast %cst_8 : f32 to vector<1x384xf32>
    %27 = arith.cmpf ole, %17, %26 : vector<1x384xf32>
    %28 = arith.andi %25, %27 : vector<1x384xi1>
    %c324_i32 = arith.constant 324 : i32
    %29 = vector.broadcast %c324_i32 : i32 to vector<1x384xi32>
    %30 = arith.cmpi slt, %10, %29 : vector<1x384xi32>
    %c0_9 = arith.constant 0 : index
    %c0_10 = arith.constant 0 : index
    %31 = vector.load %arg4[%c0_9, %c0_10] : memref<3x2xf32, #tpu.memory_space<vmem>>, vector<3x1xf32>
    %32 = vector.broadcast %31 : vector<3x1xf32> to vector<3x384xf32>
    %33 = arith.mulf %6, %32 : vector<3x384xf32>
    %c0_11 = arith.constant 0 : index
    %c1 = arith.constant 1 : index
    %34 = vector.load %arg4[%c0_11, %c1] : memref<3x2xf32, #tpu.memory_space<vmem>>, vector<3x1xf32>
    %35 = vector.broadcast %34 : vector<3x1xf32> to vector<3x384xf32>
    %36 = arith.addf %33, %35 : vector<3x384xf32>
    %cst_12 = arith.constant 0.000000e+00 : f32
    %37 = vector.broadcast %cst_12 : f32 to vector<3x384xf32>
    %38 = arith.maximumf %36, %37 : vector<3x384xf32>
    %cst_13 = arith.constant 0.000000e+00 : f32
    %39 = vector.shape_cast %28 : vector<1x384xi1> to vector<1x384xi1>
    %40 = vector.broadcast %39 : vector<1x384xi1> to vector<3x384xi1>
    %41 = vector.broadcast %cst_13 : f32 to vector<3x384xf32>
    %42 = arith.select %40, %38, %41 : vector<3x384xi1>, vector<3x384xf32>
    %c0_14 = arith.constant 0 : index
    %c0_15 = arith.constant 0 : index
    %43 = vector.load %arg3[%c0_14, %c0_15] : memref<16x4xf32, #tpu.memory_space<vmem>>, vector<16x3xf32>
    %c0_16 = arith.constant 0 : index
    %c3 = arith.constant 3 : index
    %44 = vector.load %arg3[%c0_16, %c3] : memref<16x4xf32, #tpu.memory_space<vmem>>, vector<16x1xf32>
    %45 = vector.shape_cast %44 : vector<16x1xf32> to vector<16x1xf32>
    %46 = vector.broadcast %45 : vector<16x1xf32> to vector<16x384xf32>
    %47 = vector.shape_cast %44 : vector<16x1xf32> to vector<16x1xf32>
    %48 = vector.broadcast %47 : vector<16x1xf32> to vector<16x384xf32>
    %49 = vector.extract_strided_slice %43 {offsets = [0, 0], sizes = [16, 1], strides = [1, 1]} : vector<16x3xf32> to vector<16x1xf32>
    %50 = vector.extract_strided_slice %42 {offsets = [0, 0], sizes = [1, 384], strides = [1, 1]} : vector<3x384xf32> to vector<1x384xf32>
    %51 = vector.broadcast %49 : vector<16x1xf32> to vector<16x384xf32>
    %52 = vector.broadcast %50 : vector<1x384xf32> to vector<16x384xf32>
    %53 = arith.mulf %51, %52 : vector<16x384xf32>
    %54 = arith.addf %46, %53 : vector<16x384xf32>
    %55 = vector.extract_strided_slice %6 {offsets = [0, 0], sizes = [1, 384], strides = [1, 1]} : vector<3x384xf32> to vector<1x384xf32>
    %56 = vector.broadcast %49 : vector<16x1xf32> to vector<16x384xf32>
    %57 = vector.broadcast %55 : vector<1x384xf32> to vector<16x384xf32>
    %58 = arith.mulf %56, %57 : vector<16x384xf32>
    %59 = arith.addf %48, %58 : vector<16x384xf32>
    %60 = vector.extract_strided_slice %43 {offsets = [0, 1], sizes = [16, 1], strides = [1, 1]} : vector<16x3xf32> to vector<16x1xf32>
    %61 = vector.extract_strided_slice %42 {offsets = [1, 0], sizes = [1, 384], strides = [1, 1]} : vector<3x384xf32> to vector<1x384xf32>
    %62 = vector.broadcast %60 : vector<16x1xf32> to vector<16x384xf32>
    %63 = vector.broadcast %61 : vector<1x384xf32> to vector<16x384xf32>
    %64 = arith.mulf %62, %63 : vector<16x384xf32>
    %65 = arith.addf %54, %64 : vector<16x384xf32>
    %66 = vector.extract_strided_slice %6 {offsets = [1, 0], sizes = [1, 384], strides = [1, 1]} : vector<3x384xf32> to vector<1x384xf32>
    %67 = vector.broadcast %60 : vector<16x1xf32> to vector<16x384xf32>
    %68 = vector.broadcast %66 : vector<1x384xf32> to vector<16x384xf32>
    %69 = arith.mulf %67, %68 : vector<16x384xf32>
    %70 = arith.addf %59, %69 : vector<16x384xf32>
    %71 = vector.extract_strided_slice %43 {offsets = [0, 2], sizes = [16, 1], strides = [1, 1]} : vector<16x3xf32> to vector<16x1xf32>
    %72 = vector.extract_strided_slice %42 {offsets = [2, 0], sizes = [1, 384], strides = [1, 1]} : vector<3x384xf32> to vector<1x384xf32>
    %73 = vector.broadcast %71 : vector<16x1xf32> to vector<16x384xf32>
    %74 = vector.broadcast %72 : vector<1x384xf32> to vector<16x384xf32>
    %75 = arith.mulf %73, %74 : vector<16x384xf32>
    %76 = arith.addf %65, %75 : vector<16x384xf32>
    %77 = vector.extract_strided_slice %6 {offsets = [2, 0], sizes = [1, 384], strides = [1, 1]} : vector<3x384xf32> to vector<1x384xf32>
    %78 = vector.broadcast %71 : vector<16x1xf32> to vector<16x384xf32>
    %79 = vector.broadcast %77 : vector<1x384xf32> to vector<16x384xf32>
    %80 = arith.mulf %78, %79 : vector<16x384xf32>
    %81 = arith.addf %70, %80 : vector<16x384xf32>
    %82 = arith.extui %30 : vector<1x384xi1> to vector<1x384xi32>
    %83 = arith.sitofp %82 : vector<1x384xi32> to vector<1x384xf32>
    %84 = vector.broadcast %83 : vector<1x384xf32> to vector<16x384xf32>
    %85 = arith.mulf %76, %84 : vector<16x384xf32>
    %86 = vector.broadcast %83 : vector<1x384xf32> to vector<16x384xf32>
    %87 = arith.mulf %81, %86 : vector<16x384xf32>
    %c0_17 = arith.constant 0 : index
    %c0_18 = arith.constant 0 : index
    %88 = vector.load %arg5[%c0_17, %c0_18] : memref<16x5xf32, #tpu.memory_space<vmem>>, vector<16x5xf32>
    %cst_19 = arith.constant dense<0.000000e+00> : vector<16xf32>
    %89 = vector.multi_reduction <add>, %85, %cst_19 [1] : vector<16x384xf32> to vector<16xf32>
    %90 = vector.shape_cast %89 : vector<16xf32> to vector<16x1xf32>
    %91 = arith.mulf %85, %85 : vector<16x384xf32>
    %cst_20 = arith.constant dense<0.000000e+00> : vector<16xf32>
    %92 = vector.multi_reduction <add>, %91, %cst_20 [1] : vector<16x384xf32> to vector<16xf32>
    %93 = vector.shape_cast %92 : vector<16xf32> to vector<16x1xf32>
    %cst_21 = arith.constant dense<0.000000e+00> : vector<16xf32>
    %94 = vector.multi_reduction <add>, %87, %cst_21 [1] : vector<16x384xf32> to vector<16xf32>
    %95 = vector.shape_cast %94 : vector<16xf32> to vector<16x1xf32>
    %96 = arith.mulf %87, %87 : vector<16x384xf32>
    %cst_22 = arith.constant dense<0.000000e+00> : vector<16xf32>
    %97 = vector.multi_reduction <add>, %96, %cst_22 [1] : vector<16x384xf32> to vector<16xf32>
    %98 = vector.shape_cast %97 : vector<16xf32> to vector<16x1xf32>
    %99 = arith.mulf %87, %85 : vector<16x384xf32>
    %cst_23 = arith.constant dense<0.000000e+00> : vector<16xf32>
    %100 = vector.multi_reduction <add>, %99, %cst_23 [1] : vector<16x384xf32> to vector<16xf32>
    %101 = vector.shape_cast %100 : vector<16xf32> to vector<16x1xf32>
    %102 = tpu.concatenate %90, %93, %95, %98, %101 in 1 : vector<16x1xf32>, vector<16x1xf32>, vector<16x1xf32>, vector<16x1xf32>, vector<16x1xf32> -> vector<16x5xf32>
    %103 = arith.addf %88, %102 : vector<16x5xf32>
    %c0_24 = arith.constant 0 : index
    %c0_25 = arith.constant 0 : index
    %104 = vector.load %arg5[%c0_24, %c0_25] : memref<16x5xf32, #tpu.memory_space<vmem>>, vector<16x5xf32>
    tpu.vector_store %arg5[%c0_24, %c0_25], %103 {strides = array<i32>} : memref<16x5xf32, #tpu.memory_space<vmem>>, vector<16x5xf32>,
    return
  }
  func.func @transform_0(%arg0: i32, %arg1: i32) -> (i32, i32, i32) {
    %c0_i32 = arith.constant 0 : i32
    %c0_i32_0 = arith.constant 0 : i32
    return %arg0, %c0_i32, %arg1 : i32, i32, i32
  }
  func.func @transform_1(%arg0: i32, %arg1: i32) -> (i32, i32) {
    %c0_i32 = arith.constant 0 : i32
    %c0_i32_0 = arith.constant 0 : i32
    %c0_i32_1 = arith.constant 0 : i32
    return %c0_i32, %c0_i32_0 : i32, i32
  }
  func.func @transform_2(%arg0: i32, %arg1: i32) -> (i32, i32) {
    %c0_i32 = arith.constant 0 : i32
    %c0_i32_0 = arith.constant 0 : i32
    %c0_i32_1 = arith.constant 0 : i32
    return %c0_i32, %c0_i32_0 : i32, i32
  }
  func.func @transform_3(%arg0: i32, %arg1: i32) -> (i32, i32) {
    %c0_i32 = arith.constant 0 : i32
    %c0_i32_0 = arith.constant 0 : i32
    %c0_i32_1 = arith.constant 0 : i32
    return %c0_i32, %c0_i32_0 : i32, i32
  }
}

module attributes {stable_mosaic.version = 11 : i64} {
  func.func @_apply_kernel(%arg0: i32, %arg1: i32, %arg2: memref<1x3x384xf32, #tpu.memory_space<vmem>>, %arg3: memref<16x7xf32, #tpu.memory_space<vmem>>, %arg4: memref<3x2xf32, #tpu.memory_space<vmem>>, %arg5: memref<1x16x384xf32, #tpu.memory_space<vmem>>) attributes {dimension_semantics = [#tpu.dimension_semantics<parallel>, #tpu.dimension_semantics<parallel>], iteration_bounds = array<i64: 2, 1>, scalar_prefetch = 0 : i64, scratch_operands = 0 : i64, tpu.core_type = #tpu.core_type<tc>, window_params = [{transform_indices = @transform_0, window_bounds = array<i64: 1, 3, 384>}, {pipeline_mode = #tpu.pipeline_mode<synchronous>, transform_indices = @transform_1, window_bounds = array<i64: 16, 7>}, {pipeline_mode = #tpu.pipeline_mode<synchronous>, transform_indices = @transform_2, window_bounds = array<i64: 3, 2>}, {transform_indices = @transform_3, window_bounds = array<i64: 1, 16, 384>}]} {
    %c0 = arith.constant 0 : index
    %c0_0 = arith.constant 0 : index
    %c0_1 = arith.constant 0 : index
    %0 = vector.load %arg2[%c0, %c0_0, %c0_1] : memref<1x3x384xf32, #tpu.memory_space<vmem>>, vector<1x3x384xf32>
    %1 = vector.shape_cast %0 : vector<1x3x384xf32> to vector<3x384xf32>
    %2 = tpu.iota {dimensions = array<i32: 1>} : vector<1x384xi32>
    %c384_i32 = arith.constant 384 : i32
    %3 = arith.muli %arg1, %c384_i32 : i32
    %4 = vector.broadcast %3 : i32 to vector<1x384xi32>
    %5 = arith.addi %2, %4 : vector<1x384xi32>
    %6 = arith.sitofp %5 : vector<1x384xi32> to vector<1x384xf32>
    %cst = arith.constant 1.800000e+01 : f32
    %7 = vector.broadcast %cst : f32 to vector<1x384xf32>
    %8 = arith.divf %6, %7 : vector<1x384xf32>
    %9 = math.floor %8 : vector<1x384xf32>
    %cst_2 = arith.constant 1.800000e+01 : f32
    %10 = vector.broadcast %cst_2 : f32 to vector<1x384xf32>
    %11 = arith.mulf %10, %9 : vector<1x384xf32>
    %12 = arith.subf %6, %11 : vector<1x384xf32>
    %cst_3 = arith.constant 1.000000e+00 : f32
    %13 = vector.broadcast %cst_3 : f32 to vector<1x384xf32>
    %14 = arith.cmpf oge, %9, %13 : vector<1x384xf32>
    %cst_4 = arith.constant 1.600000e+01 : f32
    %15 = vector.broadcast %cst_4 : f32 to vector<1x384xf32>
    %16 = arith.cmpf ole, %9, %15 : vector<1x384xf32>
    %17 = arith.andi %14, %16 : vector<1x384xi1>
    %cst_5 = arith.constant 1.000000e+00 : f32
    %18 = vector.broadcast %cst_5 : f32 to vector<1x384xf32>
    %19 = arith.cmpf oge, %12, %18 : vector<1x384xf32>
    %20 = arith.andi %17, %19 : vector<1x384xi1>
    %cst_6 = arith.constant 1.600000e+01 : f32
    %21 = vector.broadcast %cst_6 : f32 to vector<1x384xf32>
    %22 = arith.cmpf ole, %12, %21 : vector<1x384xf32>
    %23 = arith.andi %20, %22 : vector<1x384xi1>
    %c0_7 = arith.constant 0 : index
    %c0_8 = arith.constant 0 : index
    %24 = vector.load %arg4[%c0_7, %c0_8] : memref<3x2xf32, #tpu.memory_space<vmem>>, vector<3x1xf32>
    %25 = vector.broadcast %24 : vector<3x1xf32> to vector<3x384xf32>
    %26 = arith.mulf %1, %25 : vector<3x384xf32>
    %c0_9 = arith.constant 0 : index
    %c1 = arith.constant 1 : index
    %27 = vector.load %arg4[%c0_9, %c1] : memref<3x2xf32, #tpu.memory_space<vmem>>, vector<3x1xf32>
    %28 = vector.broadcast %27 : vector<3x1xf32> to vector<3x384xf32>
    %29 = arith.addf %26, %28 : vector<3x384xf32>
    %cst_10 = arith.constant 0.000000e+00 : f32
    %30 = vector.broadcast %cst_10 : f32 to vector<3x384xf32>
    %31 = arith.maximumf %29, %30 : vector<3x384xf32>
    %cst_11 = arith.constant 0.000000e+00 : f32
    %32 = vector.shape_cast %23 : vector<1x384xi1> to vector<1x384xi1>
    %33 = vector.broadcast %32 : vector<1x384xi1> to vector<3x384xi1>
    %34 = vector.broadcast %cst_11 : f32 to vector<3x384xf32>
    %35 = arith.select %33, %31, %34 : vector<3x384xi1>, vector<3x384xf32>
    %c0_12 = arith.constant 0 : index
    %c0_13 = arith.constant 0 : index
    %36 = vector.load %arg3[%c0_12, %c0_13] : memref<16x7xf32, #tpu.memory_space<vmem>>, vector<16x3xf32>
    %c0_14 = arith.constant 0 : index
    %c3 = arith.constant 3 : index
    %37 = vector.load %arg3[%c0_14, %c3] : memref<16x7xf32, #tpu.memory_space<vmem>>, vector<16x3xf32>
    %c0_15 = arith.constant 0 : index
    %c6 = arith.constant 6 : index
    %38 = vector.load %arg3[%c0_15, %c6] : memref<16x7xf32, #tpu.memory_space<vmem>>, vector<16x1xf32>
    %39 = vector.shape_cast %38 : vector<16x1xf32> to vector<16x1xf32>
    %40 = vector.broadcast %39 : vector<16x1xf32> to vector<16x384xf32>
    %41 = vector.extract_strided_slice %36 {offsets = [0, 0], sizes = [16, 1], strides = [1, 1]} : vector<16x3xf32> to vector<16x1xf32>
    %42 = vector.extract_strided_slice %1 {offsets = [0, 0], sizes = [1, 384], strides = [1, 1]} : vector<3x384xf32> to vector<1x384xf32>
    %43 = vector.broadcast %41 : vector<16x1xf32> to vector<16x384xf32>
    %44 = vector.broadcast %42 : vector<1x384xf32> to vector<16x384xf32>
    %45 = arith.mulf %43, %44 : vector<16x384xf32>
    %46 = arith.addf %40, %45 : vector<16x384xf32>
    %47 = vector.extract_strided_slice %37 {offsets = [0, 0], sizes = [16, 1], strides = [1, 1]} : vector<16x3xf32> to vector<16x1xf32>
    %48 = vector.extract_strided_slice %35 {offsets = [0, 0], sizes = [1, 384], strides = [1, 1]} : vector<3x384xf32> to vector<1x384xf32>
    %49 = vector.broadcast %47 : vector<16x1xf32> to vector<16x384xf32>
    %50 = vector.broadcast %48 : vector<1x384xf32> to vector<16x384xf32>
    %51 = arith.mulf %49, %50 : vector<16x384xf32>
    %52 = arith.addf %46, %51 : vector<16x384xf32>
    %53 = vector.extract_strided_slice %36 {offsets = [0, 1], sizes = [16, 1], strides = [1, 1]} : vector<16x3xf32> to vector<16x1xf32>
    %54 = vector.extract_strided_slice %1 {offsets = [1, 0], sizes = [1, 384], strides = [1, 1]} : vector<3x384xf32> to vector<1x384xf32>
    %55 = vector.broadcast %53 : vector<16x1xf32> to vector<16x384xf32>
    %56 = vector.broadcast %54 : vector<1x384xf32> to vector<16x384xf32>
    %57 = arith.mulf %55, %56 : vector<16x384xf32>
    %58 = arith.addf %52, %57 : vector<16x384xf32>
    %59 = vector.extract_strided_slice %37 {offsets = [0, 1], sizes = [16, 1], strides = [1, 1]} : vector<16x3xf32> to vector<16x1xf32>
    %60 = vector.extract_strided_slice %35 {offsets = [1, 0], sizes = [1, 384], strides = [1, 1]} : vector<3x384xf32> to vector<1x384xf32>
    %61 = vector.broadcast %59 : vector<16x1xf32> to vector<16x384xf32>
    %62 = vector.broadcast %60 : vector<1x384xf32> to vector<16x384xf32>
    %63 = arith.mulf %61, %62 : vector<16x384xf32>
    %64 = arith.addf %58, %63 : vector<16x384xf32>
    %65 = vector.extract_strided_slice %36 {offsets = [0, 2], sizes = [16, 1], strides = [1, 1]} : vector<16x3xf32> to vector<16x1xf32>
    %66 = vector.extract_strided_slice %1 {offsets = [2, 0], sizes = [1, 384], strides = [1, 1]} : vector<3x384xf32> to vector<1x384xf32>
    %67 = vector.broadcast %65 : vector<16x1xf32> to vector<16x384xf32>
    %68 = vector.broadcast %66 : vector<1x384xf32> to vector<16x384xf32>
    %69 = arith.mulf %67, %68 : vector<16x384xf32>
    %70 = arith.addf %64, %69 : vector<16x384xf32>
    %71 = vector.extract_strided_slice %37 {offsets = [0, 2], sizes = [16, 1], strides = [1, 1]} : vector<16x3xf32> to vector<16x1xf32>
    %72 = vector.extract_strided_slice %35 {offsets = [2, 0], sizes = [1, 384], strides = [1, 1]} : vector<3x384xf32> to vector<1x384xf32>
    %73 = vector.broadcast %71 : vector<16x1xf32> to vector<16x384xf32>
    %74 = vector.broadcast %72 : vector<1x384xf32> to vector<16x384xf32>
    %75 = arith.mulf %73, %74 : vector<16x384xf32>
    %76 = arith.addf %70, %75 : vector<16x384xf32>
    %c0_16 = arith.constant 0 : index
    %c0_17 = arith.constant 0 : index
    %c0_18 = arith.constant 0 : index
    %77 = vector.load %arg5[%c0_16, %c0_17, %c0_18] : memref<1x16x384xf32, #tpu.memory_space<vmem>>, vector<1x16x384xf32>
    %78 = vector.shape_cast %77 : vector<1x16x384xf32> to vector<16x384xf32>
    %79 = vector.shape_cast %76 : vector<16x384xf32> to vector<1x16x384xf32>
    tpu.vector_store %arg5[%c0_16, %c0_17, %c0_18], %79 {strides = array<i32>} : memref<1x16x384xf32, #tpu.memory_space<vmem>>, vector<1x16x384xf32>,
    return
  }
  func.func @transform_0(%arg0: i32, %arg1: i32) -> (i32, i32, i32) {
    %c0_i32 = arith.constant 0 : i32
    %c0_i32_0 = arith.constant 0 : i32
    return %arg0, %c0_i32, %arg1 : i32, i32, i32
  }
  func.func @transform_1(%arg0: i32, %arg1: i32) -> (i32, i32) {
    %c0_i32 = arith.constant 0 : i32
    %c0_i32_0 = arith.constant 0 : i32
    %c0_i32_1 = arith.constant 0 : i32
    return %c0_i32, %c0_i32_0 : i32, i32
  }
  func.func @transform_2(%arg0: i32, %arg1: i32) -> (i32, i32) {
    %c0_i32 = arith.constant 0 : i32
    %c0_i32_0 = arith.constant 0 : i32
    %c0_i32_1 = arith.constant 0 : i32
    return %c0_i32, %c0_i32_0 : i32, i32
  }
  func.func @transform_3(%arg0: i32, %arg1: i32) -> (i32, i32, i32) {
    %c0_i32 = arith.constant 0 : i32
    %c0_i32_0 = arith.constant 0 : i32
    return %arg0, %c0_i32, %arg1 : i32, i32, i32
  }
}

</mosaic_0001>

<llo_original>
// kernel: resblock_forward.3
$region0: #{resblock_forward.3}
  #allocation0 [shape = 'u32[]', space=smem, size = 0x4, offset = 0x4, fixed_abs, tag = 'smem constant byte address 0x4 - core index']
  #allocation1 [shape = 'u32[144,128]{1,0:T(1,128)}', space=vmem, size = 0x12000, scoped, tag = 'internal scratch']
  %s0 = inlined_call_operand.vmem [shape: f32[2,3,384], index: 0, kind: input, shape index: {}]
  %s1 = inlined_call_operand.vmem [shape: f32[3,2], index: 1, kind: output, shape index: {}]
  %s2 = sld [smem:[#allocation0]]
  $region41: #{resblock_forward.3} parent=0
    _
  %s4 = ssub.s32 1, %s2
  %s5 = scalar_select 0, %s4, %s2
  loop: start=0, step=1, limit=4
  $region2: #{resblock_forward.3} parent=0 // loop_pre_header
    _
  $region3: #{resblock_forward.3} parent=0 // loop_header
    %s7 = sphi 0, %s11
    %p8 = scmp.ge.s32.totalorder %s7, 4
    %s14 = sphi 0, %s26
    %s15 = sphi 0, %s22
    %s16 = sphi 0, %s14
    %s17 = sphi 0, %s15
    %s18 = sphi 0, %s16
    %s19 = sphi 0, %s17
    %s31 = sphi 0, %s33
    %s34 = sphi 0, %s31
    %s35 = sphi 0, %s34
    %s51 = sphi 0, %s35
    %s55 = sphi 0, %s55
    %s57 = sphi 0, %s55
    %s58 = sphi 0, %s57
    %s72 = sphi 0, %s58
  $region4: #{resblock_forward.3} parent=0 // loop_header_branch
    %10 = sbr.rel (%p8) target = $region8
  $region5: #{resblock_forward.3} parent=0 // loop_body
    %s12 = ssub.s32 %s7, 1
    %s13 = ssub.s32 %s7, 2
    %s20 = sadd.s32 1, %s15
    %p21 = scmp.ge.s32.totalorder %s20, 1
    %s22 = scalar_select %p21, 0, %s20
    %s23 = sadd.s32 1, %s14
    %s24 = scalar_select %p21, %s23, %s14
    %p25 = scmp.ge.s32.totalorder %s24, 2
    %s26 = scalar_select %p25, 0, %s24
    %s27 = ssub.s32 %s14, %s26
    %s28 = ssub.s32 %s15, %s22
    %s29 = sor.u32 %s27, %s28
    %p30 = scmp.eq.s32.totalorder %s29, 0
    %s32 = sadd.s32 %s31, 1
    %s33 = scalar_select %p30, %s31, %s32
    %p36 = pneg %p30
    %p37 = scmp.eq.s32.totalorder %s7, 1
    %p38 = por %p36, %p37
    %p39 = scmp.ne.s32.totalorder %s31, %s34
    %p40 = scmp.eq.s32.totalorder %s7, 0
    %p41 = por %p39, %p40
    %p42 = scmp.ne.s32.totalorder %s31, %s34
    %p43 = scmp.eq.s32.totalorder %s12, 1
    %p44 = por %p42, %p43
    %p45 = scmp.ne.s32.totalorder %s34, %s35
    %p46 = scmp.eq.s32.totalorder %s12, 0
    %p47 = por %p45, %p46
    %p48 = scmp.ne.s32.totalorder %s34, %s35
    %p49 = scmp.eq.s32.totalorder %s13, 1
    %p50 = por %p48, %p49
    %p52 = scmp.ne.s32.totalorder %s35, %s51
    %p53 = scmp.eq.s32.totalorder %s13, 0
    %p54 = por %p52, %p53
    %s56 = sadd.s32 %s55, 1
    %p59 = scmp.eq.s32.totalorder %s7, 1
    %p60 = scmp.ne.s32.totalorder %s55, %s57
    %p61 = scmp.eq.s32.totalorder %s7, 0
    %p62 = por %p60, %p61
    %p63 = scmp.ne.s32.totalorder %s55, %s57
    %p64 = scmp.eq.s32.totalorder %s12, 1
    %p65 = por %p63, %p64
    %p66 = scmp.ne.s32.totalorder %s57, %s58
    %p67 = scmp.eq.s32.totalorder %s12, 0
    %p68 = por %p66, %p67
    %p69 = scmp.ne.s32.totalorder %s57, %s58
    %p70 = scmp.eq.s32.totalorder %s13, 1
    %p71 = por %p69, %p70
    %p73 = scmp.ne.s32.totalorder %s58, %s72
    %p74 = scmp.eq.s32.totalorder %s13, 0
    %p75 = por %p73, %p74
    %p76 = scmp.le.s32.totalorder 1, %s7
    %p77 = scmp.lt.s32.totalorder %s7, 3
    %p78 = pnand %p76, %p77
    %p79 = pneg %p78
    // Predicated region
    $region9: #{resblock_forward.3} parent=5 // pred_check
      _
    $region10: #{resblock_forward.3} parent=5 // pred_check_branch
      %81 = sbr.rel (%p78) target = $region12
    $region11: #{resblock_forward.3} parent=5 // pred_region
      %s82 = ssub.s32 %s7, 1
    $region12: #{resblock_forward.3} parent=5 // pred_fallthru
      _
    %p83 = scmp.lt.s32.totalorder %s7, 2
    // Predicated region
    $region13: #{resblock_forward.3} parent=5 // pred_check
      %p84 = pneg %p83
    $region14: #{resblock_forward.3} parent=5 // pred_check_branch
      %86 = sbr.rel (%p84) target = $region16
    $region15: #{resblock_forward.3} parent=5 // pred_region
      // Predicated region
      $region17: #{resblock_forward.3} parent=15 // pred_check
        %p87 = pneg %p41
      $region18: #{resblock_forward.3} parent=15 // pred_check_branch
        %89 = sbr.rel (%p87) target = $region20
      $region19: #{resblock_forward.3} parent=15 // pred_region
        %s90 = smul.u32 3, %s15
        %p91 = scmp.lt.s32.totalorder %s14, 1
        %s92 = scalar_select %p91, %s14, 1
        %p93 = scmp.lt.s32.totalorder %s90, 2
        %s94 = scalar_select %p93, %s90, 2
        %s95 = smul.addr %s92, 3
        %s96 = sadd.s32 %s94, %s95
        %s97 = smul.addr %s96, 4
        %s98 = scalar_lea.vmem %s0, %s97
        %s99 = smul.u32 3, %s15
      $region20: #{resblock_forward.3} parent=15 // pred_fallthru
        _
    $region16: #{resblock_forward.3} parent=5 // pred_fallthru
      _
    %p100 = scmp.le.s32.totalorder 1, %s7
    %p101 = scmp.lt.s32.totalorder %s7, 3
    %p102 = pnand %p100, %p101
    %p103 = pneg %p102
    // Predicated region
    $region21: #{resblock_forward.3} parent=5 // pred_check
      _
    $region22: #{resblock_forward.3} parent=5 // pred_check_branch
      %105 = sbr.rel (%p102) target = $region24
    $region23: #{resblock_forward.3} parent=5 // pred_region
      %s106 = ssub.s32 %s7, 1
      %s107 = smul.u32 3, %s17
      %p108 = scmp.lt.s32.totalorder %s16, 1
      %s109 = scalar_select %p108, %s16, 1
      %p110 = scmp.lt.s32.totalorder %s107, 2
      %s111 = scalar_select %p110, %s107, 2
      %s112 = smul.addr %s109, 3
      %s113 = sadd.s32 %s111, %s112
      %s114 = smul.addr %s113, 4
      %s115 = scalar_lea.vmem %s0, %s114
      %p116 = pneg %p47
      %p117 = pneg %p44
      %p118 = pneg %p68
      %p119 = pneg %p65
      %s120 = smul.u32 3, %s17
      %p121 = scmp.lt.s32.totalorder %s16, 1
      %s122 = scalar_select %p121, %s16, 1
      %p123 = scmp.lt.s32.totalorder %s120, 2
      %s124 = scalar_select %p123, %s120, 2
      %s125 = smul.addr %s122, 3
      %s126 = sadd.s32 %s124, %s125
      %s127 = smul.addr %s126, 4
      %s128 = scalar_lea.vmem %s0, %s127
      %s129 = smul.u32 3, %s17
      %p130 = scmp.eq.s32.totalorder %s16, 0
      %p131 = scmp.eq.s32.totalorder %s17, 0
      %p132 = pnand %p130, %p131
      %p133 = pneg %p132
      // Predicated region
      $region25: #{resblock_forward.3} parent=23 // pred_check
        _
      $region26: #{resblock_forward.3} parent=23 // pred_check_branch
        %135 = sbr.rel (%p132) target = $region28
      $region27: #{resblock_forward.3} parent=23 // pred_region
        %vm136 = vcmask 10240
        %137 = vst.msk [vmem:[%s1] sm:$0x7] %vm136, 0.0
      $region28: #{resblock_forward.3} parent=23 // pred_fallthru
        _
      %v138 = vld [vmem:[%s128] sm:$0x77]
      %v139 = vld [vmem:[%s128 + $0x8] sm:$0x7]
      %v140 = vld [vmem:[%s1] sm:$0x7]
      %v142 = vcombine.high %v138, %v138
      %vm144 = vcmask 1042432
      %v145 = vsel %vm144, %v138, 0.0
      %v146 = vsel %vm144, %v142, 0.0
      %v147 = vadd.f32 %v145, %v146
      %v148 = vsel %vm144, %v139, 0.0
      %v149 = vadd.f32 %v147, %v148
      %150 = vadd.xlane.f32.xlu0 %v149
      %v151 = vpop.xlane.xlu0 %150
      %v152 = vmul.f32 %v138, %v138
      %v153 = vmul.f32 %v139, %v139
      %v155 = vcombine.high %v152, %v152
      %v157 = vsel %vm144, %v152, 0.0
      %v158 = vsel %vm144, %v155, 0.0
      %v159 = vadd.f32 %v157, %v158
      %v160 = vsel %vm144, %v153, 0.0
      %v161 = vadd.f32 %v159, %v160
      %162 = vadd.xlane.f32.xlu0 %v161
      %v163 = vpop.xlane.xlu0 %162
      %vm164 = vcmask 7168
      %v165 = vsel %vm164, %v151, %v163
      %v166 = vadd.f32 %v140, %v165
      %vm167 = vcmask 10240
      %168 = vst.msk [vmem:[%s1] sm:$0x7] %vm167, %v166
      // Predicated region
      $region29: #{resblock_forward.3} parent=23 // pred_check
        %p169 = pneg %p65
      $region30: #{resblock_forward.3} parent=23 // pred_check_branch
        %171 = sbr.rel (%p169) target = $region32
      $region31: #{resblock_forward.3} parent=23 // pred_region
        _
      $region32: #{resblock_forward.3} parent=23 // pred_fallthru
        _
      // Predicated region
      $region33: #{resblock_forward.3} parent=23 // pred_check
        %p172 = pneg %p65
      $region34: #{resblock_forward.3} parent=23 // pred_check_branch
        %174 = sbr.rel (%p172) target = $region36
      $region35: #{resblock_forward.3} parent=23 // pred_region
        _
      $region36: #{resblock_forward.3} parent=23 // pred_fallthru
        _
    $region24: #{resblock_forward.3} parent=5 // pred_fallthru
      _
    %p175 = scmp.le.s32.totalorder 2, %s7
    // Predicated region
    $region37: #{resblock_forward.3} parent=5 // pred_check
      %p176 = pneg %p175
    $region38: #{resblock_forward.3} parent=5 // pred_check_branch
      %178 = sbr.rel (%p176) target = $region40
    $region39: #{resblock_forward.3} parent=5 // pred_region
      %s179 = ssub.s32 %s7, 2
    $region40: #{resblock_forward.3} parent=5 // pred_fallthru
      _
  $region6: #{resblock_forward.3} parent=0 // loop_footer
    %s11 = sadd.s32 1, %s7
  $region7: #{resblock_forward.3} parent=0 // loop_footer_branch
    %6 = sbr.rel target = $region3
  $region8: #{resblock_forward.3} parent=0 // loop_exit
    _

// kernel: resblock_forward.5
$region0: #{resblock_forward.5}
  #allocation0 [shape = 'u32[]', space=smem, size = 0x4, offset = 0x4, fixed_abs, tag = 'smem constant byte address 0x4 - core index']
  #allocation1 [shape = 'u32[144,128]{1,0:T(1,128)}', space=vmem, size = 0x12000, scoped, tag = 'internal scratch']
  %s0 = inlined_call_operand.vmem [shape: f32[2,3,384], index: 0, kind: input, shape index: {}]
  %s1 = inlined_call_operand.vmem [shape: f32[16,7], index: 1, kind: input, shape index: {}]
  %s2 = inlined_call_operand.vmem [shape: f32[3,2], index: 2, kind: input, shape index: {}]
  %s3 = inlined_call_operand.vmem [shape: f32[2,16,324], index: 3, kind: output, shape index: {}]
  %s4 = sld [smem:[#allocation0]]
  $region45: #{resblock_forward.5} parent=0
    _
  %s6 = ssub.s32 1, %s4
  %s7 = scalar_select 0, %s6, %s4
  loop: start=0, step=1, limit=4
  $region2: #{resblock_forward.5} parent=0 // loop_pre_header
    _
  $region3: #{resblock_forward.5} parent=0 // loop_header
    %s9 = sphi 0, %s13
    %p10 = scmp.ge.s32.totalorder %s9, 4
    %s16 = sphi 0, %s28
    %s17 = sphi 0, %s24
    %s18 = sphi 0, %s16
    %s19 = sphi 0, %s17
    %s20 = sphi 0, %s18
    %s21 = sphi 0, %s19
    %s33 = sphi 0, %s35
    %s36 = sphi 0, %s33
    %s37 = sphi 0, %s36
    %s53 = sphi 0, %s37
    %s57 = sphi 0, %s57
    %s59 = sphi 0, %s57
    %s60 = sphi 0, %s59
    %s74 = sphi 0, %s60
    %s78 = sphi 0, %s78
    %s80 = sphi 0, %s78
    %s81 = sphi 0, %s80
    %s95 = sphi 0, %s81
    %s103 = sphi 0, %s105
    %s106 = sphi 0, %s103
    %s107 = sphi 0, %s106
    %s123 = sphi 0, %s107
  $region4: #{resblock_forward.5} parent=0 // loop_header_branch
    %12 = sbr.rel (%p10) target = $region8
  $region5: #{resblock_forward.5} parent=0 // loop_body
    %s14 = ssub.s32 %s9, 1
    %s15 = ssub.s32 %s9, 2
    %s22 = sadd.s32 1, %s17
    %p23 = scmp.ge.s32.totalorder %s22, 1
    %s24 = scalar_select %p23, 0, %s22
    %s25 = sadd.s32 1, %s16
    %s26 = scalar_select %p23, %s25, %s16
    %p27 = scmp.ge.s32.totalorder %s26, 2
    %s28 = scalar_select %p27, 0, %s26
    %s29 = ssub.s32 %s16, %s28
    %s30 = ssub.s32 %s17, %s24
    %s31 = sor.u32 %s29, %s30
    %p32 = scmp.eq.s32.totalorder %s31, 0
    %s34 = sadd.s32 %s33, 1
    %s35 = scalar_select %p32, %s33, %s34
    %p38 = pneg %p32
    %p39 = scmp.eq.s32.totalorder %s9, 1
    %p40 = por %p38, %p39
    %p41 = scmp.ne.s32.totalorder %s33, %s36
    %p42 = scmp.eq.s32.totalorder %s9, 0
    %p43 = por %p41, %p42
    %p44 = scmp.ne.s32.totalorder %s33, %s36
    %p45 = scmp.eq.s32.totalorder %s14, 1
    %p46 = por %p44, %p45
    %p47 = scmp.ne.s32.totalorder %s36, %s37
    %p48 = scmp.eq.s32.totalorder %s14, 0
    %p49 = por %p47, %p48
    %p50 = scmp.ne.s32.totalorder %s36, %s37
    %p51 = scmp.eq.s32.totalorder %s15, 1
    %p52 = por %p50, %p51
    %p54 = scmp.ne.s32.totalorder %s37, %s53
    %p55 = scmp.eq.s32.totalorder %s15, 0
    %p56 = por %p54, %p55
    %s58 = sadd.s32 %s57, 1
    %p61 = scmp.eq.s32.totalorder %s9, 1
    %p62 = scmp.ne.s32.totalorder %s57, %s59
    %p63 = scmp.eq.s32.totalorder %s9, 0
    %p64 = por %p62, %p63
    %p65 = scmp.ne.s32.totalorder %s57, %s59
    %p66 = scmp.eq.s32.totalorder %s14, 1
    %p67 = por %p65, %p66
    %p68 = scmp.ne.s32.totalorder %s59, %s60
    %p69 = scmp.eq.s32.totalorder %s14, 0
    %p70 = por %p68, %p69
    %p71 = scmp.ne.s32.totalorder %s59, %s60
    %p72 = scmp.eq.s32.totalorder %s15, 1
    %p73 = por %p71, %p72
    %p75 = scmp.ne.s32.totalorder %s60, %s74
    %p76 = scmp.eq.s32.totalorder %s15, 0
    %p77 = por %p75, %p76
    %s79 = sadd.s32 %s78, 1
    %p82 = scmp.eq.s32.totalorder %s9, 1
    %p83 = scmp.ne.s32.totalorder %s78, %s80
    %p84 = scmp.eq.s32.totalorder %s9, 0
    %p85 = por %p83, %p84
    %p86 = scmp.ne.s32.totalorder %s78, %s80
    %p87 = scmp.eq.s32.totalorder %s14, 1
    %p88 = por %p86, %p87
    %p89 = scmp.ne.s32.totalorder %s80, %s81
    %p90 = scmp.eq.s32.totalorder %s14, 0
    %p91 = por %p89, %p90
    %p92 = scmp.ne.s32.totalorder %s80, %s81
    %p93 = scmp.eq.s32.totalorder %s15, 1
    %p94 = por %p92, %p93
    %p96 = scmp.ne.s32.totalorder %s81, %s95
    %p97 = scmp.eq.s32.totalorder %s15, 0
    %p98 = por %p96, %p97
    %s99 = ssub.s32 %s16, %s28
    %s100 = ssub.s32 %s17, %s24
    %s101 = sor.u32 %s99, %s100
    %p102 = scmp.eq.s32.totalorder %s101, 0
    %s104 = sadd.s32 %s103, 1
    %s105 = scalar_select %p102, %s103, %s104
    %p108 = pneg %p102
    %p109 = scmp.eq.s32.totalorder %s9, 1
    %p110 = por %p108, %p109
    %p111 = scmp.ne.s32.totalorder %s103, %s106
    %p112 = scmp.eq.s32.totalorder %s9, 0
    %p113 = por %p111, %p112
    %p114 = scmp.ne.s32.totalorder %s103, %s106
    %p115 = scmp.eq.s32.totalorder %s14, 1
    %p116 = por %p114, %p115
    %p117 = scmp.ne.s32.totalorder %s106, %s107
    %p118 = scmp.eq.s32.totalorder %s14, 0
    %p119 = por %p117, %p118
    %p120 = scmp.ne.s32.totalorder %s106, %s107
    %p121 = scmp.eq.s32.totalorder %s15, 1
    %p122 = por %p120, %p121
    %p124 = scmp.ne.s32.totalorder %s107, %s123
    %p125 = scmp.eq.s32.totalorder %s15, 0
    %p126 = por %p124, %p125
    %p127 = scmp.le.s32.totalorder 1, %s9
    %p128 = scmp.lt.s32.totalorder %s9, 3
    %p129 = pnand %p127, %p128
    %p130 = pneg %p129
    // Predicated region
    $region9: #{resblock_forward.5} parent=5 // pred_check
      _
    $region10: #{resblock_forward.5} parent=5 // pred_check_branch
      %132 = sbr.rel (%p129) target = $region12
    $region11: #{resblock_forward.5} parent=5 // pred_region
      %s133 = ssub.s32 %s9, 1
      // Predicated region
      $region13: #{resblock_forward.5} parent=11 // pred_check
        %p134 = pneg %p70
      $region14: #{resblock_forward.5} parent=11 // pred_check_branch
        %136 = sbr.rel (%p134) target = $region16
      $region15: #{resblock_forward.5} parent=11 // pred_region
        _
      $region16: #{resblock_forward.5} parent=11 // pred_fallthru
        _
      // Predicated region
      $region17: #{resblock_forward.5} parent=11 // pred_check
        %p137 = pneg %p91
      $region18: #{resblock_forward.5} parent=11 // pred_check_branch
        %139 = sbr.rel (%p137) target = $region20
      $region19: #{resblock_forward.5} parent=11 // pred_region
        _
      $region20: #{resblock_forward.5} parent=11 // pred_fallthru
        _
    $region12: #{resblock_forward.5} parent=5 // pred_fallthru
      _
    %p140 = scmp.lt.s32.totalorder %s9, 2
    // Predicated region
    $region21: #{resblock_forward.5} parent=5 // pred_check
      %p141 = pneg %p140
    $region22: #{resblock_forward.5} parent=5 // pred_check_branch
      %143 = sbr.rel (%p141) target = $region24
    $region23: #{resblock_forward.5} parent=5 // pred_region
      // Predicated region
      $region25: #{resblock_forward.5} parent=23 // pred_check
        %p144 = pneg %p43
      $region26: #{resblock_forward.5} parent=23 // pred_check_branch
        %146 = sbr.rel (%p144) target = $region28
      $region27: #{resblock_forward.5} parent=23 // pred_region
        %s147 = smul.u32 3, %s17
        %p148 = scmp.lt.s32.totalorder %s16, 1
        %s149 = scalar_select %p148, %s16, 1
        %p150 = scmp.lt.s32.totalorder %s147, 2
        %s151 = scalar_select %p150, %s147, 2
        %s152 = smul.addr %s149, 3
        %s153 = sadd.s32 %s151, %s152
        %s154 = smul.addr %s153, 4
        %s155 = scalar_lea.vmem %s0, %s154
        %s156 = smul.u32 3, %s17
      $region28: #{resblock_forward.5} parent=23 // pred_fallthru
        _
    $region24: #{resblock_forward.5} parent=5 // pred_fallthru
      _
    %p157 = scmp.le.s32.totalorder 1, %s9
    %p158 = scmp.lt.s32.totalorder %s9, 3
    %p159 = pnand %p157, %p158
    %p160 = pneg %p159
    // Predicated region
    $region29: #{resblock_forward.5} parent=5 // pred_check
      _
    $region30: #{resblock_forward.5} parent=5 // pred_check_branch
      %162 = sbr.rel (%p159) target = $region32
    $region31: #{resblock_forward.5} parent=5 // pred_region
      %s163 = ssub.s32 %s9, 1
      %s164 = smul.u32 3, %s19
      %p165 = scmp.lt.s32.totalorder %s18, 1
      %s166 = scalar_select %p165, %s18, 1
      %p167 = scmp.lt.s32.totalorder %s164, 2
      %s168 = scalar_select %p167, %s164, 2
      %s169 = smul.addr %s166, 3
      %s170 = sadd.s32 %s168, %s169
      %s171 = smul.addr %s170, 4
      %s172 = scalar_lea.vmem %s0, %s171
      %p173 = pneg %p49
      %p174 = pneg %p46
      %p175 = pneg %p70
      %p176 = pneg %p67
      %p177 = pneg %p91
      %p178 = pneg %p88
      %p179 = pneg %p119
      %p180 = pneg %p116
      %s181 = smul.u32 3, %s19
      %p182 = scmp.lt.s32.totalorder %s18, 1
      %s183 = scalar_select %p182, %s18, 1
      %p184 = scmp.lt.s32.totalorder %s181, 2
      %s185 = scalar_select %p184, %s181, 2
      %s186 = smul.addr %s183, 6
      %s187 = sadd.s32 %s185, %s186
      %s188 = smul.addr %s187, 8
      %s189 = scalar_lea.vmem %s3, %s188
      %s190 = smul.u32 3, %s19
      %p191 = scmp.lt.s32.totalorder %s18, 1
      %s192 = scalar_select %p191, %s18, 1
      %p193 = scmp.lt.s32.totalorder %s190, 2
      %s194 = scalar_select %p193, %s190, 2
      %s195 = smul.addr %s192, 3
      %s196 = sadd.s32 %s194, %s195
      %s197 = smul.addr %s196, 4
      %s198 = scalar_lea.vmem %s0, %s197
      %s199 = smul.u32 3, %s19
      %s200 = smul.u32 3, %s19
      %p201 = scmp.lt.s32.totalorder %s18, 1
      %s202 = scalar_select %p201, %s18, 1
      %p203 = scmp.lt.s32.totalorder %s200, 2
      %s204 = scalar_select %p203, %s200, 2
      %s205 = smul.addr %s202, 6
      %s206 = sadd.s32 %s204, %s205
      %s207 = smul.addr %s206, 8
      %s208 = scalar_lea.vmem %s3, %s207
      %s209 = smul.u32 3, %s19
      %v210 = vld [vmem:[%s198] sm:$0x77]
      %v211 = vld [vmem:[%s198 + $0x8] sm:$0x7]
      %v212 = vlaneseq
      %v213 = vand.u32 %v212, 127
      %v214 = vadd.s32 %v213, 128
      %v215 = vadd.s32 %v213, 256
      %s216 = smul.u32 %s19, 384
      %v217 = vstv %s216
      %v218 = vadd.s32 %v213, %v217
      %v219 = vadd.s32 %v214, %v217
      %v220 = vadd.s32 %v215, %v217
      %v221 = vcvt.s32.f32 %v218
      %v222 = vcvt.s32.f32 %v219
      %v223 = vcvt.s32.f32 %v220
      %v224 = vrcp.pop 18.0
      %v225 = vmul.f32 %v221, %v224
      %v226 = vmul.f32 %v222, %v224
      %v227 = vmul.f32 %v223, %v224
      %v228 = vfloor.f32 %v225
      %v229 = vfloor.f32 %v226
      %v230 = vfloor.f32 %v227
      %v231 = vmul.f32 %v228, 18.0
      %v232 = vmul.f32 %v229, 18.0
      %v233 = vmul.f32 %v230, 18.0
      %v234 = vsub.f32 %v221, %v231
      %v235 = vsub.f32 %v222, %v232
      %v236 = vsub.f32 %v223, %v233
      %vm237 = vcmp.ge.f32.partialorder %v228, 1.0
      %vm238 = vcmp.ge.f32.partialorder %v229, 1.0
      %vm239 = vcmp.ge.f32.partialorder %v230, 1.0
      %vm240 = vcmp.le.f32.partialorder %v228, 16.0
      %vm241 = vcmp.le.f32.partialorder %v229, 16.0
      %vm242 = vcmp.le.f32.partialorder %v230, 16.0
      %vm243 = vmand %vm237, %vm240
      %vm244 = vmand %vm238, %vm241
      %vm245 = vmand %vm239, %vm242
      %vm246 = vcmp.ge.f32.partialorder %v234, 1.0
      %vm247 = vcmp.ge.f32.partialorder %v235, 1.0
      %vm248 = vcmp.ge.f32.partialorder %v236, 1.0
      %vm249 = vmand %vm243, %vm246
      %vm250 = vmand %vm244, %vm247
      %vm251 = vmand %vm245, %vm248
      %vm252 = vcmp.le.f32.partialorder %v234, 16.0
      %vm253 = vcmp.le.f32.partialorder %v235, 16.0
      %vm254 = vcmp.le.f32.partialorder %v236, 16.0
      %vm255 = vmand %vm249, %vm252
      %vm256 = vmand %vm250, %vm253
      %vm257 = vmand %vm251, %vm254
      %v258 = vld [vmem:[%s2] sm:$0x7]
      %260 = vset.pattern.permute.xlu0 0
      %261 = vperm.xlu0 %260, %v258
      %v262 = vpop.permute.xlu0 %261
      %v264 = vunpack.c.l.s4 839922192
      %v265 = vunpack.c.0.s8 %v264
      %v266 = vlaneseq
      %v267 = vshrl.u32 %v266, 7
      %v268 = vsub.s32 %v265, %v267
      %v269 = vrot.slane %v262, %v268
      %v271 = vmul.f32 %v210, %v269
      %v272 = vmul.f32 %v211, %v269
      %273 = vset.pattern.permute.xlu0 1
      %274 = vperm.xlu0 %273, %v258
      %v275 = vpop.permute.xlu0 %274
      %v277 = vunpack.c.l.s4 839922192
      %v278 = vunpack.c.0.s8 %v277
      %v279 = vlaneseq
      %v280 = vshrl.u32 %v279, 7
      %v281 = vsub.s32 %v278, %v280
      %v282 = vrot.slane %v275, %v281
      %v284 = vadd.f32 %v271, %v282
      %v285 = vadd.f32 %v272, %v282
      %v286 = vmax.f32 %v284, 0.0
      %v287 = vmax.f32 %v285, 0.0
      %v288 = vsel %vm255, 1, 0
      %v289 = vsel %vm256, 1, 0
      %v290 = vsel %vm257, 1, 0
      %vm291 = vcmp.eq.s32.totalorder %v288, 1
      %vm292 = vcmp.eq.s32.totalorder %v289, 1
      %vm293 = vcmp.eq.s32.totalorder %v290, 1
      %v295 = vcombine.high %v286, %v286
      %v297 = vsel %vm291, %v286, 0.0
      %v298 = vsel %vm292, %v295, 0.0
      %v299 = vsel %vm293, %v287, 0.0
      %v300 = vld [vmem:[%s1] sm:$0xff]
      %v301 = vld [vmem:[%s1 + $0x8] sm:$0xff]
      %303 = vset.pattern.permute.xlu0 6
      %304 = vperm.xlu0 %303, %v300
      %v305 = vpop.permute.xlu0 %304
      %308 = vset.pattern.permute.xlu0 6
      %309 = vperm.xlu0 %308, %v301
      %v310 = vpop.permute.xlu0 %309
      %312 = vset.pattern.permute.xlu0 0
      %313 = vperm.xlu0 %312, %v300
      %v314 = vpop.permute.xlu0 %313
      %316 = vset.pattern.permute.xlu0 0
      %317 = vperm.xlu0 %316, %v301
      %v318 = vpop.permute.xlu0 %317
      %v322 = vlaneseq
      %v323 = vshrl.u32 %v322, 7
      %v324 = vsub.s32 0, %v323
      %v325 = vrot.slane %v210, %v324
      %v326 = vlaneseq
      %v327 = vshrl.u32 %v326, 7
      %v328 = vsub.s32 4, %v327
      %v329 = vrot.slane %v210, %v328
      %v330 = vlaneseq
      %v331 = vshrl.u32 %v330, 7
      %v332 = vsub.s32 0, %v331
      %v333 = vrot.slane %v211, %v332
      %v337 = vlaneseq
      %v338 = vshrl.u32 %v337, 7
      %v339 = vsub.s32 0, %v338
      %v340 = vrot.slane %v325, %v339
      %v341 = vlaneseq
      %v342 = vshrl.u32 %v341, 7
      %v343 = vsub.s32 0, %v342
      %v344 = vrot.slane %v329, %v343
      %v345 = vlaneseq
      %v346 = vshrl.u32 %v345, 7
      %v347 = vsub.s32 0, %v346
      %v348 = vrot.slane %v333, %v347
      %v349 = vmul.f32 %v314, %v340
      %v350 = vmul.f32 %v314, %v344
      %v351 = vmul.f32 %v314, %v348
      %v352 = vmul.f32 %v318, %v340
      %v353 = vmul.f32 %v318, %v344
      %v354 = vmul.f32 %v318, %v348
      %v355 = vadd.f32 %v305, %v349
      %v356 = vadd.f32 %v305, %v350
      %v357 = vadd.f32 %v305, %v351
      %v358 = vadd.f32 %v310, %v352
      %v359 = vadd.f32 %v310, %v353
      %v360 = vadd.f32 %v310, %v354
      %361 = vset.pattern.permute.xlu0 3
      %362 = vperm.xlu0 %361, %v300
      %v363 = vpop.permute.xlu0 %362
      %365 = vset.pattern.permute.xlu0 3
      %366 = vperm.xlu0 %365, %v301
      %v367 = vpop.permute.xlu0 %366
      %v369 = vlaneseq
      %v370 = vshrl.u32 %v369, 7
      %v371 = vsub.s32 0, %v370
      %v372 = vrot.slane %v297, %v371
      %v373 = vlaneseq
      %v374 = vshrl.u32 %v373, 7
      %v375 = vsub.s32 0, %v374
      %v376 = vrot.slane %v298, %v375
      %v377 = vlaneseq
      %v378 = vshrl.u32 %v377, 7
      %v379 = vsub.s32 0, %v378
      %v380 = vrot.slane %v299, %v379
      %v381 = vmul.f32 %v363, %v372
      %v382 = vmul.f32 %v363, %v376
      %v383 = vmul.f32 %v363, %v380
      %v384 = vmul.f32 %v367, %v372
      %v385 = vmul.f32 %v367, %v376
      %v386 = vmul.f32 %v367, %v380
      %v387 = vadd.f32 %v355, %v381
      %v388 = vadd.f32 %v356, %v382
      %v389 = vadd.f32 %v357, %v383
      %v390 = vadd.f32 %v358, %v384
      %v391 = vadd.f32 %v359, %v385
      %v392 = vadd.f32 %v360, %v386
      %393 = vset.pattern.permute.xlu0 1
      %394 = vperm.xlu0 %393, %v300
      %v395 = vpop.permute.xlu0 %394
      %397 = vset.pattern.permute.xlu0 1
      %398 = vperm.xlu0 %397, %v301
      %v399 = vpop.permute.xlu0 %398
      %v401 = vlaneseq
      %v402 = vshrl.u32 %v401, 7
      %v403 = vsub.s32 1, %v402
      %v404 = vrot.slane %v210, %v403
      %v405 = vlaneseq
      %v406 = vshrl.u32 %v405, 7
      %v407 = vsub.s32 5, %v406
      %v408 = vrot.slane %v210, %v407
      %v409 = vlaneseq
      %v410 = vshrl.u32 %v409, 7
      %v411 = vsub.s32 1, %v410
      %v412 = vrot.slane %v211, %v411
      %v416 = vlaneseq
      %v417 = vshrl.u32 %v416, 7
      %v418 = vsub.s32 1, %v417
      %v419 = vrot.slane %v404, %v418
      %v420 = vlaneseq
      %v421 = vshrl.u32 %v420, 7
      %v422 = vsub.s32 1, %v421
      %v423 = vrot.slane %v408, %v422
      %v424 = vlaneseq
      %v425 = vshrl.u32 %v424, 7
      %v426 = vsub.s32 1, %v425
      %v427 = vrot.slane %v412, %v426
      %v428 = vmul.f32 %v395, %v419
      %v429 = vmul.f32 %v395, %v423
      %v430 = vmul.f32 %v395, %v427
      %v431 = vmul.f32 %v399, %v419
      %v432 = vmul.f32 %v399, %v423
      %v433 = vmul.f32 %v399, %v427
      %v434 = vadd.f32 %v387, %v428
      %v435 = vadd.f32 %v388, %v429
      %v436 = vadd.f32 %v389, %v430
      %v437 = vadd.f32 %v390, %v431
      %v438 = vadd.f32 %v391, %v432
      %v439 = vadd.f32 %v392, %v433
      %440 = vset.pattern.permute.xlu0 4
      %441 = vperm.xlu0 %440, %v300
      %v442 = vpop.permute.xlu0 %441
      %444 = vset.pattern.permute.xlu0 4
      %445 = vperm.xlu0 %444, %v301
      %v446 = vpop.permute.xlu0 %445
      %v448 = vlaneseq
      %v449 = vshrl.u32 %v448, 7
      %v450 = vsub.s32 1, %v449
      %v451 = vrot.slane %v297, %v450
      %v452 = vlaneseq
      %v453 = vshrl.u32 %v452, 7
      %v454 = vsub.s32 1, %v453
      %v455 = vrot.slane %v298, %v454
      %v456 = vlaneseq
      %v457 = vshrl.u32 %v456, 7
      %v458 = vsub.s32 1, %v457
      %v459 = vrot.slane %v299, %v458
      %v460 = vmul.f32 %v442, %v451
      %v461 = vmul.f32 %v442, %v455
      %v462 = vmul.f32 %v442, %v459
      %v463 = vmul.f32 %v446, %v451
      %v464 = vmul.f32 %v446, %v455
      %v465 = vmul.f32 %v446, %v459
      %v466 = vadd.f32 %v434, %v460
      %v467 = vadd.f32 %v435, %v461
      %v468 = vadd.f32 %v436, %v462
      %v469 = vadd.f32 %v437, %v463
      %v470 = vadd.f32 %v438, %v464
      %v471 = vadd.f32 %v439, %v465
      %472 = vset.pattern.permute.xlu0 2
      %473 = vperm.xlu0 %472, %v300
      %v474 = vpop.permute.xlu0 %473
      %476 = vset.pattern.permute.xlu0 2
      %477 = vperm.xlu0 %476, %v301
      %v478 = vpop.permute.xlu0 %477
      %v480 = vlaneseq
      %v481 = vshrl.u32 %v480, 7
      %v482 = vsub.s32 2, %v481
      %v483 = vrot.slane %v210, %v482
      %v484 = vlaneseq
      %v485 = vshrl.u32 %v484, 7
      %v486 = vsub.s32 6, %v485
      %v487 = vrot.slane %v210, %v486
      %v488 = vlaneseq
      %v489 = vshrl.u32 %v488, 7
      %v490 = vsub.s32 2, %v489
      %v491 = vrot.slane %v211, %v490
      %v495 = vlaneseq
      %v496 = vshrl.u32 %v495, 7
      %v497 = vsub.s32 2, %v496
      %v498 = vrot.slane %v483, %v497
      %v499 = vlaneseq
      %v500 = vshrl.u32 %v499, 7
      %v501 = vsub.s32 2, %v500
      %v502 = vrot.slane %v487, %v501
      %v503 = vlaneseq
      %v504 = vshrl.u32 %v503, 7
      %v505 = vsub.s32 2, %v504
      %v506 = vrot.slane %v491, %v505
      %v507 = vmul.f32 %v474, %v498
      %v508 = vmul.f32 %v474, %v502
      %v509 = vmul.f32 %v474, %v506
      %v510 = vmul.f32 %v478, %v498
      %v511 = vmul.f32 %v478, %v502
      %v512 = vmul.f32 %v478, %v506
      %v513 = vadd.f32 %v466, %v507
      %v514 = vadd.f32 %v467, %v508
      %v515 = vadd.f32 %v468, %v509
      %v516 = vadd.f32 %v469, %v510
      %v517 = vadd.f32 %v470, %v511
      %v518 = vadd.f32 %v471, %v512
      %519 = vset.pattern.permute.xlu0 5
      %520 = vperm.xlu0 %519, %v300
      %v521 = vpop.permute.xlu0 %520
      %523 = vset.pattern.permute.xlu0 5
      %524 = vperm.xlu0 %523, %v301
      %v525 = vpop.permute.xlu0 %524
      %v527 = vlaneseq
      %v528 = vshrl.u32 %v527, 7
      %v529 = vsub.s32 2, %v528
      %v530 = vrot.slane %v297, %v529
      %v531 = vlaneseq
      %v532 = vshrl.u32 %v531, 7
      %v533 = vsub.s32 2, %v532
      %v534 = vrot.slane %v298, %v533
      %v535 = vlaneseq
      %v536 = vshrl.u32 %v535, 7
      %v537 = vsub.s32 2, %v536
      %v538 = vrot.slane %v299, %v537
      %v539 = vmul.f32 %v521, %v530
      %v540 = vmul.f32 %v521, %v534
      %v541 = vmul.f32 %v521, %v538
      %v542 = vmul.f32 %v525, %v530
      %v543 = vmul.f32 %v525, %v534
      %v544 = vmul.f32 %v525, %v538
      %v545 = vadd.f32 %v513, %v539
      %v546 = vadd.f32 %v514, %v540
      %v547 = vadd.f32 %v515, %v541
      %v548 = vadd.f32 %v516, %v542
      %v549 = vadd.f32 %v517, %v543
      %v550 = vadd.f32 %v518, %v544
      %551 = vst [vmem:[%s208] sm:$0xff] %v545
      %552 = vst [vmem:[%s208 + $0x8] sm:$0xff] %v546
      %553 = vst [vmem:[%s208 + $0x10] sm:$0xff] %v547
      %554 = vst [vmem:[%s208 + $0x18] sm:$0xff] %v548
      %555 = vst [vmem:[%s208 + $0x20] sm:$0xff] %v549
      %556 = vst [vmem:[%s208 + $0x28] sm:$0xff] %v550
      %s557 = smul.u32 3, %s19
      %p558 = scmp.lt.s32.totalorder %s18, 1
      %s559 = scalar_select %p558, %s18, 1
      %p560 = scmp.lt.s32.totalorder %s557, 2
      %s561 = scalar_select %p560, %s557, 2
      %s562 = smul.addr %s559, 6
      %s563 = sadd.s32 %s561, %s562
      %s564 = smul.addr %s563, 8
      %s565 = scalar_lea.vmem %s3, %s564
      // Predicated region
      $region33: #{resblock_forward.5} parent=31 // pred_check
        %p566 = pneg %p116
      $region34: #{resblock_forward.5} parent=31 // pred_check_branch
        %568 = sbr.rel (%p566) target = $region36
      $region35: #{resblock_forward.5} parent=31 // pred_region
        %s569 = smul.u32 3, %s19
      $region36: #{resblock_forward.5} parent=31 // pred_fallthru
        _
    $region32: #{resblock_forward.5} parent=5 // pred_fallthru
      _
    %p570 = scmp.le.s32.totalorder 2, %s9
    // Predicated region
    $region37: #{resblock_forward.5} parent=5 // pred_check
      %p571 = pneg %p570
    $region38: #{resblock_forward.5} parent=5 // pred_check_branch
      %573 = sbr.rel (%p571) target = $region40
    $region39: #{resblock_forward.5} parent=5 // pred_region
      %s574 = ssub.s32 %s9, 2
      // Predicated region
      $region41: #{resblock_forward.5} parent=39 // pred_check
        %p575 = pneg %p122
      $region42: #{resblock_forward.5} parent=39 // pred_check_branch
        %577 = sbr.rel (%p575) target = $region44
      $region43: #{resblock_forward.5} parent=39 // pred_region
        %s578 = smul.u32 3, %s21
        %p579 = scmp.lt.s32.totalorder %s20, 1
        %s580 = scalar_select %p579, %s20, 1
        %p581 = scmp.lt.s32.totalorder %s578, 2
        %s582 = scalar_select %p581, %s578, 2
        %s583 = smul.addr %s580, 6
        %s584 = sadd.s32 %s582, %s583
        %s585 = smul.addr %s584, 8
        %s586 = scalar_lea.vmem %s3, %s585
      $region44: #{resblock_forward.5} parent=39 // pred_fallthru
        _
    $region40: #{resblock_forward.5} parent=5 // pred_fallthru
      _
  $region6: #{resblock_forward.5} parent=0 // loop_footer
    %s13 = sadd.s32 1, %s9
  $region7: #{resblock_forward.5} parent=0 // loop_footer_branch
    %8 = sbr.rel target = $region3
  $region8: #{resblock_forward.5} parent=0 // loop_exit
    _

// kernel: resblock_forward.4
$region0: #{resblock_forward.4}
  #allocation0 [shape = 'u32[]', space=smem, size = 0x4, offset = 0x4, fixed_abs, tag = 'smem constant byte address 0x4 - core index']
  #allocation1 [shape = 'u32[144,128]{1,0:T(1,128)}', space=vmem, size = 0x12000, scoped, tag = 'internal scratch']
  %s0 = inlined_call_operand.vmem [shape: f32[2,3,384], index: 0, kind: input, shape index: {}]
  %s1 = inlined_call_operand.vmem [shape: f32[16,4], index: 1, kind: input, shape index: {}]
  %s2 = inlined_call_operand.vmem [shape: f32[3,2], index: 2, kind: input, shape index: {}]
  %s3 = inlined_call_operand.vmem [shape: f32[16,5], index: 3, kind: output, shape index: {}]
  %s4 = sld [smem:[#allocation0]]
  $region49: #{resblock_forward.4} parent=0
    _
  %s6 = ssub.s32 1, %s4
  %s7 = scalar_select 0, %s6, %s4
  loop: start=0, step=1, limit=4
  $region2: #{resblock_forward.4} parent=0 // loop_pre_header
    _
  $region3: #{resblock_forward.4} parent=0 // loop_header
    %s9 = sphi 0, %s13
    %p10 = scmp.ge.s32.totalorder %s9, 4
    %s16 = sphi 0, %s28
    %s17 = sphi 0, %s24
    %s18 = sphi 0, %s16
    %s19 = sphi 0, %s17
    %s20 = sphi 0, %s18
    %s21 = sphi 0, %s19
    %s33 = sphi 0, %s35
    %s36 = sphi 0, %s33
    %s37 = sphi 0, %s36
    %s53 = sphi 0, %s37
    %s57 = sphi 0, %s57
    %s59 = sphi 0, %s57
    %s60 = sphi 0, %s59
    %s74 = sphi 0, %s60
    %s78 = sphi 0, %s78
    %s80 = sphi 0, %s78
    %s81 = sphi 0, %s80
    %s95 = sphi 0, %s81
    %s99 = sphi 0, %s99
    %s101 = sphi 0, %s99
    %s102 = sphi 0, %s101
    %s116 = sphi 0, %s102
  $region4: #{resblock_forward.4} parent=0 // loop_header_branch
    %12 = sbr.rel (%p10) target = $region8
  $region5: #{resblock_forward.4} parent=0 // loop_body
    %s14 = ssub.s32 %s9, 1
    %s15 = ssub.s32 %s9, 2
    %s22 = sadd.s32 1, %s17
    %p23 = scmp.ge.s32.totalorder %s22, 1
    %s24 = scalar_select %p23, 0, %s22
    %s25 = sadd.s32 1, %s16
    %s26 = scalar_select %p23, %s25, %s16
    %p27 = scmp.ge.s32.totalorder %s26, 2
    %s28 = scalar_select %p27, 0, %s26
    %s29 = ssub.s32 %s16, %s28
    %s30 = ssub.s32 %s17, %s24
    %s31 = sor.u32 %s29, %s30
    %p32 = scmp.eq.s32.totalorder %s31, 0
    %s34 = sadd.s32 %s33, 1
    %s35 = scalar_select %p32, %s33, %s34
    %p38 = pneg %p32
    %p39 = scmp.eq.s32.totalorder %s9, 1
    %p40 = por %p38, %p39
    %p41 = scmp.ne.s32.totalorder %s33, %s36
    %p42 = scmp.eq.s32.totalorder %s9, 0
    %p43 = por %p41, %p42
    %p44 = scmp.ne.s32.totalorder %s33, %s36
    %p45 = scmp.eq.s32.totalorder %s14, 1
    %p46 = por %p44, %p45
    %p47 = scmp.ne.s32.totalorder %s36, %s37
    %p48 = scmp.eq.s32.totalorder %s14, 0
    %p49 = por %p47, %p48
    %p50 = scmp.ne.s32.totalorder %s36, %s37
    %p51 = scmp.eq.s32.totalorder %s15, 1
    %p52 = por %p50, %p51
    %p54 = scmp.ne.s32.totalorder %s37, %s53
    %p55 = scmp.eq.s32.totalorder %s15, 0
    %p56 = por %p54, %p55
    %s58 = sadd.s32 %s57, 1
    %p61 = scmp.eq.s32.totalorder %s9, 1
    %p62 = scmp.ne.s32.totalorder %s57, %s59
    %p63 = scmp.eq.s32.totalorder %s9, 0
    %p64 = por %p62, %p63
    %p65 = scmp.ne.s32.totalorder %s57, %s59
    %p66 = scmp.eq.s32.totalorder %s14, 1
    %p67 = por %p65, %p66
    %p68 = scmp.ne.s32.totalorder %s59, %s60
    %p69 = scmp.eq.s32.totalorder %s14, 0
    %p70 = por %p68, %p69
    %p71 = scmp.ne.s32.totalorder %s59, %s60
    %p72 = scmp.eq.s32.totalorder %s15, 1
    %p73 = por %p71, %p72
    %p75 = scmp.ne.s32.totalorder %s60, %s74
    %p76 = scmp.eq.s32.totalorder %s15, 0
    %p77 = por %p75, %p76
    %s79 = sadd.s32 %s78, 1
    %p82 = scmp.eq.s32.totalorder %s9, 1
    %p83 = scmp.ne.s32.totalorder %s78, %s80
    %p84 = scmp.eq.s32.totalorder %s9, 0
    %p85 = por %p83, %p84
    %p86 = scmp.ne.s32.totalorder %s78, %s80
    %p87 = scmp.eq.s32.totalorder %s14, 1
    %p88 = por %p86, %p87
    %p89 = scmp.ne.s32.totalorder %s80, %s81
    %p90 = scmp.eq.s32.totalorder %s14, 0
    %p91 = por %p89, %p90
    %p92 = scmp.ne.s32.totalorder %s80, %s81
    %p93 = scmp.eq.s32.totalorder %s15, 1
    %p94 = por %p92, %p93
    %p96 = scmp.ne.s32.totalorder %s81, %s95
    %p97 = scmp.eq.s32.totalorder %s15, 0
    %p98 = por %p96, %p97
    %s100 = sadd.s32 %s99, 1
    %p103 = scmp.eq.s32.totalorder %s9, 1
    %p104 = scmp.ne.s32.totalorder %s99, %s101
    %p105 = scmp.eq.s32.totalorder %s9, 0
    %p106 = por %p104, %p105
    %p107 = scmp.ne.s32.totalorder %s99, %s101
    %p108 = scmp.eq.s32.totalorder %s14, 1
    %p109 = por %p107, %p108
    %p110 = scmp.ne.s32.totalorder %s101, %s102
    %p111 = scmp.eq.s32.totalorder %s14, 0
    %p112 = por %p110, %p111
    %p113 = scmp.ne.s32.totalorder %s101, %s102
    %p114 = scmp.eq.s32.totalorder %s15, 1
    %p115 = por %p113, %p114
    %p117 = scmp.ne.s32.totalorder %s102, %s116
    %p118 = scmp.eq.s32.totalorder %s15, 0
    %p119 = por %p117, %p118
    %p120 = scmp.le.s32.totalorder 1, %s9
    %p121 = scmp.lt.s32.totalorder %s9, 3
    %p122 = pnand %p120, %p121
    %p123 = pneg %p122
    // Predicated region
    $region9: #{resblock_forward.4} parent=5 // pred_check
      _
    $region10: #{resblock_forward.4} parent=5 // pred_check_branch
      %125 = sbr.rel (%p122) target = $region12
    $region11: #{resblock_forward.4} parent=5 // pred_region
      %s126 = ssub.s32 %s9, 1
      // Predicated region
      $region13: #{resblock_forward.4} parent=11 // pred_check
        %p127 = pneg %p70
      $region14: #{resblock_forward.4} parent=11 // pred_check_branch
        %129 = sbr.rel (%p127) target = $region16
      $region15: #{resblock_forward.4} parent=11 // pred_region
        _
      $region16: #{resblock_forward.4} parent=11 // pred_fallthru
        _
      // Predicated region
      $region17: #{resblock_forward.4} parent=11 // pred_check
        %p130 = pneg %p91
      $region18: #{resblock_forward.4} parent=11 // pred_check_branch
        %132 = sbr.rel (%p130) target = $region20
      $region19: #{resblock_forward.4} parent=11 // pred_region
        _
      $region20: #{resblock_forward.4} parent=11 // pred_fallthru
        _
    $region12: #{resblock_forward.4} parent=5 // pred_fallthru
      _
    %p133 = scmp.lt.s32.totalorder %s9, 2
    // Predicated region
    $region21: #{resblock_forward.4} parent=5 // pred_check
      %p134 = pneg %p133
    $region22: #{resblock_forward.4} parent=5 // pred_check_branch
      %136 = sbr.rel (%p134) target = $region24
    $region23: #{resblock_forward.4} parent=5 // pred_region
      // Predicated region
      $region25: #{resblock_forward.4} parent=23 // pred_check
        %p137 = pneg %p43
      $region26: #{resblock_forward.4} parent=23 // pred_check_branch
        %139 = sbr.rel (%p137) target = $region28
      $region27: #{resblock_forward.4} parent=23 // pred_region
        %s140 = smul.u32 3, %s17
        %p141 = scmp.lt.s32.totalorder %s16, 1
        %s142 = scalar_select %p141, %s16, 1
        %p143 = scmp.lt.s32.totalorder %s140, 2
        %s144 = scalar_select %p143, %s140, 2
        %s145 = smul.addr %s142, 3
        %s146 = sadd.s32 %s144, %s145
        %s147 = smul.addr %s146, 4
        %s148 = scalar_lea.vmem %s0, %s147
        %s149 = smul.u32 3, %s17
      $region28: #{resblock_forward.4} parent=23 // pred_fallthru
        _
    $region24: #{resblock_forward.4} parent=5 // pred_fallthru
      _
    %p150 = scmp.le.s32.totalorder 1, %s9
    %p151 = scmp.lt.s32.totalorder %s9, 3
    %p152 = pnand %p150, %p151
    %p153 = pneg %p152
    // Predicated region
    $region29: #{resblock_forward.4} parent=5 // pred_check
      _
    $region30: #{resblock_forward.4} parent=5 // pred_check_branch
      %155 = sbr.rel (%p152) target = $region32
    $region31: #{resblock_forward.4} parent=5 // pred_region
      %s156 = ssub.s32 %s9, 1
      %s157 = smul.u32 3, %s19
      %p158 = scmp.lt.s32.totalorder %s18, 1
      %s159 = scalar_select %p158, %s18, 1
      %p160 = scmp.lt.s32.totalorder %s157, 2
      %s161 = scalar_select %p160, %s157, 2
      %s162 = smul.addr %s159, 3
      %s163 = sadd.s32 %s161, %s162
      %s164 = smul.addr %s163, 4
      %s165 = scalar_lea.vmem %s0, %s164
      %p166 = pneg %p49
      %p167 = pneg %p46
      %p168 = pneg %p70
      %p169 = pneg %p67
      %p170 = pneg %p91
      %p171 = pneg %p88
      %p172 = pneg %p112
      %p173 = pneg %p109
      %s174 = smul.u32 3, %s19
      %p175 = scmp.lt.s32.totalorder %s18, 1
      %s176 = scalar_select %p175, %s18, 1
      %p177 = scmp.lt.s32.totalorder %s174, 2
      %s178 = scalar_select %p177, %s174, 2
      %s179 = smul.addr %s176, 3
      %s180 = sadd.s32 %s178, %s179
      %s181 = smul.addr %s180, 4
      %s182 = scalar_lea.vmem %s0, %s181
      %s183 = smul.u32 3, %s19
      %p184 = scmp.eq.s32.totalorder %s18, 0
      %p185 = scmp.eq.s32.totalorder %s19, 0
      %p186 = pnand %p184, %p185
      %p187 = pneg %p186
      // Predicated region
      $region33: #{resblock_forward.4} parent=31 // pred_check
        _
      $region34: #{resblock_forward.4} parent=31 // pred_check_branch
        %189 = sbr.rel (%p186) target = $region36
      $region35: #{resblock_forward.4} parent=31 // pred_region
        %vm190 = vcmask 39936
        %191 = vst.msk [vmem:[%s3] sm:$0xff] %vm190, 0.0
        %192 = vst.msk [vmem:[%s3 + $0x8] sm:$0xff] %vm190, 0.0
      $region36: #{resblock_forward.4} parent=31 // pred_fallthru
        _
      %v193 = vld [vmem:[%s182] sm:$0x77]
      %v194 = vld [vmem:[%s182 + $0x8] sm:$0x7]
      %v195 = vlaneseq
      %v196 = vand.u32 %v195, 127
      %v197 = vadd.s32 %v196, 128
      %v198 = vadd.s32 %v196, 256
      %s199 = smul.u32 %s19, 384
      %v200 = vstv %s199
      %v201 = vadd.s32 %v196, %v200
      %v202 = vadd.s32 %v197, %v200
      %v203 = vadd.s32 %v198, %v200
      %v204 = vcvt.s32.f32 %v201
      %v205 = vcvt.s32.f32 %v202
      %v206 = vcvt.s32.f32 %v203
      %v207 = vrcp.pop 18.0
      %v208 = vmul.f32 %v204, %v207
      %v209 = vmul.f32 %v205, %v207
      %v210 = vmul.f32 %v206, %v207
      %v211 = vfloor.f32 %v208
      %v212 = vfloor.f32 %v209
      %v213 = vfloor.f32 %v210
      %v214 = vmul.f32 %v211, 18.0
      %v215 = vmul.f32 %v212, 18.0
      %v216 = vmul.f32 %v213, 18.0
      %v217 = vsub.f32 %v204, %v214
      %v218 = vsub.f32 %v205, %v215
      %v219 = vsub.f32 %v206, %v216
      %vm220 = vcmp.ge.f32.partialorder %v211, 1.0
      %vm221 = vcmp.ge.f32.partialorder %v212, 1.0
      %vm222 = vcmp.ge.f32.partialorder %v213, 1.0
      %vm223 = vcmp.le.f32.partialorder %v211, 16.0
      %vm224 = vcmp.le.f32.partialorder %v212, 16.0
      %vm225 = vcmp.le.f32.partialorder %v213, 16.0
      %vm226 = vmand %vm220, %vm223
      %vm227 = vmand %vm221, %vm224
      %vm228 = vmand %vm222, %vm225
      %vm229 = vcmp.ge.f32.partialorder %v217, 1.0
      %vm230 = vcmp.ge.f32.partialorder %v218, 1.0
      %vm231 = vcmp.ge.f32.partialorder %v219, 1.0
      %vm232 = vmand %vm226, %vm229
      %vm233 = vmand %vm227, %vm230
      %vm234 = vmand %vm228, %vm231
      %vm235 = vcmp.le.f32.partialorder %v217, 16.0
      %vm236 = vcmp.le.f32.partialorder %v218, 16.0
      %vm237 = vcmp.le.f32.partialorder %v219, 16.0
      %vm238 = vmand %vm232, %vm235
      %vm239 = vmand %vm233, %vm236
      %vm240 = vmand %vm234, %vm237
      %vm241 = vcmp.lt.s32.totalorder %v201, 324
      %vm242 = vcmp.lt.s32.totalorder %v202, 324
      %vm243 = vcmp.lt.s32.totalorder %v203, 324
      %v244 = vld [vmem:[%s2] sm:$0x7]
      %246 = vset.pattern.permute.xlu0 0
      %247 = vperm.xlu0 %246, %v244
      %v248 = vpop.permute.xlu0 %247
      %v250 = vunpack.c.l.s4 839922192
      %v251 = vunpack.c.0.s8 %v250
      %v252 = vlaneseq
      %v253 = vshrl.u32 %v252, 7
      %v254 = vsub.s32 %v251, %v253
      %v255 = vrot.slane %v248, %v254
      %v257 = vmul.f32 %v193, %v255
      %v258 = vmul.f32 %v194, %v255
      %259 = vset.pattern.permute.xlu0 1
      %260 = vperm.xlu0 %259, %v244
      %v261 = vpop.permute.xlu0 %260
      %v263 = vunpack.c.l.s4 839922192
      %v264 = vunpack.c.0.s8 %v263
      %v265 = vlaneseq
      %v266 = vshrl.u32 %v265, 7
      %v267 = vsub.s32 %v264, %v266
      %v268 = vrot.slane %v261, %v267
      %v270 = vadd.f32 %v257, %v268
      %v271 = vadd.f32 %v258, %v268
      %v272 = vmax.f32 %v270, 0.0
      %v273 = vmax.f32 %v271, 0.0
      %v274 = vsel %vm238, 1, 0
      %v275 = vsel %vm239, 1, 0
      %v276 = vsel %vm240, 1, 0
      %vm277 = vcmp.eq.s32.totalorder %v274, 1
      %vm278 = vcmp.eq.s32.totalorder %v275, 1
      %vm279 = vcmp.eq.s32.totalorder %v276, 1
      %v281 = vcombine.high %v272, %v272
      %v283 = vsel %vm277, %v272, 0.0
      %v284 = vsel %vm278, %v281, 0.0
      %v285 = vsel %vm279, %v273, 0.0
      %v286 = vld [vmem:[%s1] sm:$0xff]
      %v287 = vld [vmem:[%s1 + $0x8] sm:$0xff]
      %289 = vset.pattern.permute.xlu0 3
      %290 = vperm.xlu0 %289, %v286
      %v291 = vpop.permute.xlu0 %290
      %294 = vset.pattern.permute.xlu0 3
      %295 = vperm.xlu0 %294, %v287
      %v296 = vpop.permute.xlu0 %295
      %298 = vset.pattern.permute.xlu0 0
      %299 = vperm.xlu0 %298, %v286
      %v300 = vpop.permute.xlu0 %299
      %302 = vset.pattern.permute.xlu0 0
      %303 = vperm.xlu0 %302, %v287
      %v304 = vpop.permute.xlu0 %303
      %v306 = vlaneseq
      %v307 = vshrl.u32 %v306, 7
      %v308 = vsub.s32 0, %v307
      %v309 = vrot.slane %v283, %v308
      %v310 = vlaneseq
      %v311 = vshrl.u32 %v310, 7
      %v312 = vsub.s32 0, %v311
      %v313 = vrot.slane %v284, %v312
      %v314 = vlaneseq
      %v315 = vshrl.u32 %v314, 7
      %v316 = vsub.s32 0, %v315
      %v317 = vrot.slane %v285, %v316
      %v318 = vmul.f32 %v300, %v309
      %v319 = vmul.f32 %v300, %v313
      %v320 = vmul.f32 %v300, %v317
      %v321 = vmul.f32 %v304, %v309
      %v322 = vmul.f32 %v304, %v313
      %v323 = vmul.f32 %v304, %v317
      %v324 = vadd.f32 %v291, %v318
      %v325 = vadd.f32 %v291, %v319
      %v326 = vadd.f32 %v291, %v320
      %v327 = vadd.f32 %v296, %v321
      %v328 = vadd.f32 %v296, %v322
      %v329 = vadd.f32 %v296, %v323
      %v332 = vlaneseq
      %v333 = vshrl.u32 %v332, 7
      %v334 = vsub.s32 0, %v333
      %v335 = vrot.slane %v193, %v334
      %v336 = vlaneseq
      %v337 = vshrl.u32 %v336, 7
      %v338 = vsub.s32 4, %v337
      %v339 = vrot.slane %v193, %v338
      %v340 = vlaneseq
      %v341 = vshrl.u32 %v340, 7
      %v342 = vsub.s32 0, %v341
      %v343 = vrot.slane %v194, %v342
      %v347 = vlaneseq
      %v348 = vshrl.u32 %v347, 7
      %v349 = vsub.s32 0, %v348
      %v350 = vrot.slane %v335, %v349
      %v351 = vlaneseq
      %v352 = vshrl.u32 %v351, 7
      %v353 = vsub.s32 0, %v352
      %v354 = vrot.slane %v339, %v353
      %v355 = vlaneseq
      %v356 = vshrl.u32 %v355, 7
      %v357 = vsub.s32 0, %v356
      %v358 = vrot.slane %v343, %v357
      %v359 = vmul.f32 %v300, %v350
      %v360 = vmul.f32 %v300, %v354
      %v361 = vmul.f32 %v300, %v358
      %v362 = vmul.f32 %v304, %v350
      %v363 = vmul.f32 %v304, %v354
      %v364 = vmul.f32 %v304, %v358
      %v365 = vadd.f32 %v291, %v359
      %v366 = vadd.f32 %v291, %v360
      %v367 = vadd.f32 %v291, %v361
      %v368 = vadd.f32 %v296, %v362
      %v369 = vadd.f32 %v296, %v363
      %v370 = vadd.f32 %v296, %v364
      %371 = vset.pattern.permute.xlu0 1
      %372 = vperm.xlu0 %371, %v286
      %v373 = vpop.permute.xlu0 %372
      %375 = vset.pattern.permute.xlu0 1
      %376 = vperm.xlu0 %375, %v287
      %v377 = vpop.permute.xlu0 %376
      %v379 = vlaneseq
      %v380 = vshrl.u32 %v379, 7
      %v381 = vsub.s32 1, %v380
      %v382 = vrot.slane %v283, %v381
      %v383 = vlaneseq
      %v384 = vshrl.u32 %v383, 7
      %v385 = vsub.s32 1, %v384
      %v386 = vrot.slane %v284, %v385
      %v387 = vlaneseq
      %v388 = vshrl.u32 %v387, 7
      %v389 = vsub.s32 1, %v388
      %v390 = vrot.slane %v285, %v389
      %v391 = vmul.f32 %v373, %v382
      %v392 = vmul.f32 %v373, %v386
      %v393 = vmul.f32 %v373, %v390
      %v394 = vmul.f32 %v377, %v382
      %v395 = vmul.f32 %v377, %v386
      %v396 = vmul.f32 %v377, %v390
      %v397 = vadd.f32 %v324, %v391
      %v398 = vadd.f32 %v325, %v392
      %v399 = vadd.f32 %v326, %v393
      %v400 = vadd.f32 %v327, %v394
      %v401 = vadd.f32 %v328, %v395
      %v402 = vadd.f32 %v329, %v396
      %v403 = vlaneseq
      %v404 = vshrl.u32 %v403, 7
      %v405 = vsub.s32 1, %v404
      %v406 = vrot.slane %v193, %v405
      %v407 = vlaneseq
      %v408 = vshrl.u32 %v407, 7
      %v409 = vsub.s32 5, %v408
      %v410 = vrot.slane %v193, %v409
      %v411 = vlaneseq
      %v412 = vshrl.u32 %v411, 7
      %v413 = vsub.s32 1, %v412
      %v414 = vrot.slane %v194, %v413
      %v418 = vlaneseq
      %v419 = vshrl.u32 %v418, 7
      %v420 = vsub.s32 1, %v419
      %v421 = vrot.slane %v406, %v420
      %v422 = vlaneseq
      %v423 = vshrl.u32 %v422, 7
      %v424 = vsub.s32 1, %v423
      %v425 = vrot.slane %v410, %v424
      %v426 = vlaneseq
      %v427 = vshrl.u32 %v426, 7
      %v428 = vsub.s32 1, %v427
      %v429 = vrot.slane %v414, %v428
      %v430 = vmul.f32 %v373, %v421
      %v431 = vmul.f32 %v373, %v425
      %v432 = vmul.f32 %v373, %v429
      %v433 = vmul.f32 %v377, %v421
      %v434 = vmul.f32 %v377, %v425
      %v435 = vmul.f32 %v377, %v429
      %v436 = vadd.f32 %v365, %v430
      %v437 = vadd.f32 %v366, %v431
      %v438 = vadd.f32 %v367, %v432
      %v439 = vadd.f32 %v368, %v433
      %v440 = vadd.f32 %v369, %v434
      %v441 = vadd.f32 %v370, %v435
      %442 = vset.pattern.permute.xlu0 2
      %443 = vperm.xlu0 %442, %v286
      %v444 = vpop.permute.xlu0 %443
      %446 = vset.pattern.permute.xlu0 2
      %447 = vperm.xlu0 %446, %v287
      %v448 = vpop.permute.xlu0 %447
      %v450 = vlaneseq
      %v451 = vshrl.u32 %v450, 7
      %v452 = vsub.s32 2, %v451
      %v453 = vrot.slane %v283, %v452
      %v454 = vlaneseq
      %v455 = vshrl.u32 %v454, 7
      %v456 = vsub.s32 2, %v455
      %v457 = vrot.slane %v284, %v456
      %v458 = vlaneseq
      %v459 = vshrl.u32 %v458, 7
      %v460 = vsub.s32 2, %v459
      %v461 = vrot.slane %v285, %v460
      %v462 = vmul.f32 %v444, %v453
      %v463 = vmul.f32 %v444, %v457
      %v464 = vmul.f32 %v444, %v461
      %v465 = vmul.f32 %v448, %v453
      %v466 = vmul.f32 %v448, %v457
      %v467 = vmul.f32 %v448, %v461
      %v468 = vadd.f32 %v397, %v462
      %v469 = vadd.f32 %v398, %v463
      %v470 = vadd.f32 %v399, %v464
      %v471 = vadd.f32 %v400, %v465
      %v472 = vadd.f32 %v401, %v466
      %v473 = vadd.f32 %v402, %v467
      %v474 = vlaneseq
      %v475 = vshrl.u32 %v474, 7
      %v476 = vsub.s32 2, %v475
      %v477 = vrot.slane %v193, %v476
      %v478 = vlaneseq
      %v479 = vshrl.u32 %v478, 7
      %v480 = vsub.s32 6, %v479
      %v481 = vrot.slane %v193, %v480
      %v482 = vlaneseq
      %v483 = vshrl.u32 %v482, 7
      %v484 = vsub.s32 2, %v483
      %v485 = vrot.slane %v194, %v484
      %v489 = vlaneseq
      %v490 = vshrl.u32 %v489, 7
      %v491 = vsub.s32 2, %v490
      %v492 = vrot.slane %v477, %v491
      %v493 = vlaneseq
      %v494 = vshrl.u32 %v493, 7
      %v495 = vsub.s32 2, %v494
      %v496 = vrot.slane %v481, %v495
      %v497 = vlaneseq
      %v498 = vshrl.u32 %v497, 7
      %v499 = vsub.s32 2, %v498
      %v500 = vrot.slane %v485, %v499
      %v501 = vmul.f32 %v444, %v492
      %v502 = vmul.f32 %v444, %v496
      %v503 = vmul.f32 %v444, %v500
      %v504 = vmul.f32 %v448, %v492
      %v505 = vmul.f32 %v448, %v496
      %v506 = vmul.f32 %v448, %v500
      %v507 = vadd.f32 %v436, %v501
      %v508 = vadd.f32 %v437, %v502
      %v509 = vadd.f32 %v438, %v503
      %v510 = vadd.f32 %v439, %v504
      %v511 = vadd.f32 %v440, %v505
      %v512 = vadd.f32 %v441, %v506
      %v513 = vsel %vm241, 1, 0
      %v514 = vsel %vm242, 1, 0
      %v515 = vsel %vm243, 1, 0
      %v516 = vcvt.s32.f32 %v513
      %v517 = vcvt.s32.f32 %v514
      %v518 = vcvt.s32.f32 %v515
      %v519 = vmul.f32 %v468, %v516
      %v520 = vmul.f32 %v469, %v517
      %v521 = vmul.f32 %v470, %v518
      %v522 = vmul.f32 %v471, %v516
      %v523 = vmul.f32 %v472, %v517
      %v524 = vmul.f32 %v473, %v518
      %v525 = vmul.f32 %v507, %v516
      %v526 = vmul.f32 %v508, %v517
      %v527 = vmul.f32 %v509, %v518
      %v528 = vmul.f32 %v510, %v516
      %v529 = vmul.f32 %v511, %v517
      %v530 = vmul.f32 %v512, %v518
      %v531 = vld [vmem:[%s3] sm:$0xff]
      %v532 = vld [vmem:[%s3 + $0x8] sm:$0xff]
      %v533 = vadd.f32 %v519, %v520
      %v534 = vadd.f32 %v533, %v521
      %535 = vadd.xlane.f32.xlu0 %v534
      %v536 = vpop.xlane.xlu0 %535
      %v537 = vadd.f32 %v522, %v523
      %v538 = vadd.f32 %v537, %v524
      %539 = vadd.xlane.f32.xlu0 %v538
      %v540 = vpop.xlane.xlu0 %539
      %v541 = vmul.f32 %v519, %v519
      %v542 = vmul.f32 %v520, %v520
      %v543 = vmul.f32 %v521, %v521
      %v544 = vmul.f32 %v522, %v522
      %v545 = vmul.f32 %v523, %v523
      %v546 = vmul.f32 %v524, %v524
      %v547 = vadd.f32 %v541, %v542
      %v548 = vadd.f32 %v547, %v543
      %549 = vadd.xlane.f32.xlu0 %v548
      %v550 = vpop.xlane.xlu0 %549
      %v551 = vadd.f32 %v544, %v545
      %v552 = vadd.f32 %v551, %v546
      %553 = vadd.xlane.f32.xlu0 %v552
      %v554 = vpop.xlane.xlu0 %553
      %v555 = vadd.f32 %v525, %v526
      %v556 = vadd.f32 %v555, %v527
      %557 = vadd.xlane.f32.xlu0 %v556
      %v558 = vpop.xlane.xlu0 %557
      %v559 = vadd.f32 %v528, %v529
      %v560 = vadd.f32 %v559, %v530
      %561 = vadd.xlane.f32.xlu0 %v560
      %v562 = vpop.xlane.xlu0 %561
      %v563 = vmul.f32 %v525, %v525
      %v564 = vmul.f32 %v526, %v526
      %v565 = vmul.f32 %v527, %v527
      %v566 = vmul.f32 %v528, %v528
      %v567 = vmul.f32 %v529, %v529
      %v568 = vmul.f32 %v530, %v530
      %v569 = vadd.f32 %v563, %v564
      %v570 = vadd.f32 %v569, %v565
      %571 = vadd.xlane.f32.xlu0 %v570
      %v572 = vpop.xlane.xlu0 %571
      %v573 = vadd.f32 %v566, %v567
      %v574 = vadd.f32 %v573, %v568
      %575 = vadd.xlane.f32.xlu0 %v574
      %v576 = vpop.xlane.xlu0 %575
      %v577 = vmul.f32 %v525, %v519
      %v578 = vmul.f32 %v526, %v520
      %v579 = vmul.f32 %v527, %v521
      %v580 = vmul.f32 %v528, %v522
      %v581 = vmul.f32 %v529, %v523
      %v582 = vmul.f32 %v530, %v524
      %v583 = vadd.f32 %v577, %v578
      %v584 = vadd.f32 %v583, %v579
      %585 = vadd.xlane.f32.xlu0 %v584
      %v586 = vpop.xlane.xlu0 %585
      %v587 = vadd.f32 %v580, %v581
      %v588 = vadd.f32 %v587, %v582
      %589 = vadd.xlane.f32.xlu0 %v588
      %v590 = vpop.xlane.xlu0 %589
      %vm591 = vcmask 7168
      %v592 = vsel %vm591, %v536, %v550
      %v593 = vsel %vm591, %v540, %v554
      %vm594 = vcmask 15360
      %v595 = vsel %vm594, %v592, %v558
      %v596 = vsel %vm594, %v593, %v562
      %vm597 = vcmask 23552
      %v598 = vsel %vm597, %v595, %v572
      %v599 = vsel %vm597, %v596, %v576
      %vm600 = vcmask 31744
      %v601 = vsel %vm600, %v598, %v586
      %v602 = vsel %vm600, %v599, %v590
      %v603 = vadd.f32 %v531, %v601
      %v604 = vadd.f32 %v532, %v602
      %vm605 = vcmask 39936
      %606 = vst.msk [vmem:[%s3] sm:$0xff] %vm605, %v603
      %607 = vst.msk [vmem:[%s3 + $0x8] sm:$0xff] %vm605, %v604
      // Predicated region
      $region37: #{resblock_forward.4} parent=31 // pred_check
        %p608 = pneg %p109
      $region38: #{resblock_forward.4} parent=31 // pred_check_branch
        %610 = sbr.rel (%p608) target = $region40
      $region39: #{resblock_forward.4} parent=31 // pred_region
        _
      $region40: #{resblock_forward.4} parent=31 // pred_fallthru
        _
      // Predicated region
      $region41: #{resblock_forward.4} parent=31 // pred_check
        %p611 = pneg %p109
      $region42: #{resblock_forward.4} parent=31 // pred_check_branch
        %613 = sbr.rel (%p611) target = $region44
      $region43: #{resblock_forward.4} parent=31 // pred_region
        _
      $region44: #{resblock_forward.4} parent=31 // pred_fallthru
        _
    $region32: #{resblock_forward.4} parent=5 // pred_fallthru
      _
    %p614 = scmp.le.s32.totalorder 2, %s9
    // Predicated region
    $region45: #{resblock_forward.4} parent=5 // pred_check
      %p615 = pneg %p614
    $region46: #{resblock_forward.4} parent=5 // pred_check_branch
      %617 = sbr.rel (%p615) target = $region48
    $region47: #{resblock_forward.4} parent=5 // pred_region
      %s618 = ssub.s32 %s9, 2
    $region48: #{resblock_forward.4} parent=5 // pred_fallthru
      _
  $region6: #{resblock_forward.4} parent=0 // loop_footer
    %s13 = sadd.s32 1, %s9
  $region7: #{resblock_forward.4} parent=0 // loop_footer_branch
    %8 = sbr.rel target = $region3
  $region8: #{resblock_forward.4} parent=0 // loop_exit
    _

</llo_original>
